<compile_context>
chip_gen: v7x
topology: tpu7x:2x2x1
jax: 0.10.0
libtpu: 0.0.40
codegen_flags: <defaults>
</compile_context>

<pallas_src>
import math

import jax
import jax.numpy as jnp
from jax.experimental import pallas as pl
from jax.experimental.pallas import tpu as pltpu

# ---------------------------------------------------------------------------
# Model hyper-parameters (small, consistent with the module's __init__)
# ---------------------------------------------------------------------------
B = 2               # batch
T = 8               # sequence length
D_IN = 16           # s2one_input_size
H_RNN = 32          # rnn_hidden_size
N_LAYERS = 2        # rnn_num_layers (fixed at 2 here)
H_VAE = 32          # vae_hidden_size
LATENT = 8          # vae_latent_output_size
N_SAN = 16          # num_sanitized_features

BP = 8              # batch padded to one sublane tile (8 rows)
G = 4 * H_RNN       # 128 gate lanes

_F32 = jnp.float32
_BF16 = jnp.bfloat16

# Row offsets inside the packed (SLAB_ROWS, 128) weight slab (all multiples of 8).
R_WIH0 = 0                    # (D_IN, 4H)   gate-reordered, transposed
R_WHH0 = R_WIH0 + D_IN        # (H,    4H)
R_B0 = R_WHH0 + H_RNN         # row 48: bih0+bhh0 (padded to 8 rows)
R_W1 = R_B0 + 8               # (2H,   4H) = [Wih1 ; Whh1]  (fused layer-1 weight)
R_B1 = R_W1 + 2 * H_RNN       # row 120: bih1+bhh1 (padded to 8 rows)
R_VAEW = R_B1 + 8             # (H_VAE, 128) = [we1 | w21|w22 | wd2 | 0]
R_WD1 = R_VAEW + H_VAE        # (LATENT, 128) = [wd1 | 0]
R_BIAS = R_WD1 + 8            # row 168: [be1 | b21 | b22 | bd1 | bd2 | 0]
SLAB_ROWS = R_BIAS + 8        # 176

# Lane offsets inside the VAE weight block / bias row.
L_WE1 = 0
L_W2122 = H_VAE               # 32  (w21 | w22 side by side -> one fused matmul)
L_WD2 = L_W2122 + 2 * LATENT  # 48
L_BE1 = 0
L_B2122 = H_VAE               # 32
L_BD1 = L_B2122 + 2 * LATENT  # 48
L_BD2 = L_BD1 + H_VAE         # 80

# Output slab layout (lanes of the (BP, 128) packed output).
O_Z = 0
O_DEC = LATENT                # 8
O_KL = LATENT + N_SAN         # 24 (kl replicated over 8 lanes)


# ---------------------------------------------------------------------------
# Pallas kernel
# ---------------------------------------------------------------------------
def s2one_kernel(x_ref, eps_ref, w_ref, out_ref):
    H = H_RNN

    def mm(a, b_bf16):
        # MXU matmul: bf16 inputs, f32 accumulation (single pass on v5e/v6e/v7x).
        return jnp.dot(a.astype(_BF16), b_bf16, preferred_element_type=jnp.float32)

    # ---- weights: loaded / cast once, outside the serial time loop ----
    wih0 = w_ref[R_WIH0:R_WIH0 + D_IN, :].astype(_BF16)        # (16, 128)
    whh0 = w_ref[R_WHH0:R_WHH0 + H, :].astype(_BF16)           # (32, 128)
    b0 = w_ref[R_B0:R_B0 + 1, :]                               # (1, 128) f32
    w1 = w_ref[R_W1:R_W1 + 2 * H, :].astype(_BF16)             # (64, 128) = [Wih1;Whh1]
    b1 = w_ref[R_B1:R_B1 + 1, :]                               # (1, 128) f32

    # ---- hoisted layer-0 input projection: one matmul for all T steps ----
    xw0 = mm(x_ref[...], wih0) + b0                            # (T*BP, 128) f32

    def cell(gates, c):
        # Gate order [i, f, o, g]: one sigmoid over 3H lanes, one tanh over H lanes.
        sig = jax.nn.sigmoid(gates[:, :3 * H])
        g = jnp.tanh(gates[:, 3 * H:])
        i = sig[:, 0:H]
        f = sig[:, H:2 * H]
        o = sig[:, 2 * H:3 * H]
        c_new = f * c + i * g
        return o * jnp.tanh(c_new), c_new

    zeros = jnp.zeros((BP, H), jnp.float32)
    h0, c0, h1, c1 = zeros, zeros, zeros, zeros
    # Statically unrolled (T is a compile-time constant): xw0 slices are static and
    # the scheduler can overlap layer 1 of step t with layer 0 of step t+1.
    # TODO(synk): on v7x one could keep whh0/w1 MXU-stationary via matmul_push_rhs.
    for t in range(T):
        g0 = xw0[t * BP:(t + 1) * BP, :] + mm(h0, whh0)        # layer 0: recurrent only
        h0, c0 = cell(g0, c0)
        g1 = mm(jnp.concatenate([h0, h1], axis=-1), w1) + b1   # layer 1: fused ih+hh
        h1, c1 = cell(g1, c1)

    feat = h1                                                  # == output[:, -1, :]

    # ---- VAE encode / reparameterize / decode ----
    vw = w_ref[R_VAEW:R_VAEW + H_VAE, :]                       # (32, 128)
    we1 = vw[:, L_WE1:L_WE1 + H_VAE].astype(_BF16)             # (32, 32)
    w2122 = vw[:, L_W2122:L_W2122 + 2 * LATENT].astype(_BF16)  # (32, 16) [w21 | w22]
    wd2 = vw[:, L_WD2:L_WD2 + N_SAN].astype(_BF16)             # (32, 16)
    wd1 = w_ref[R_WD1:R_WD1 + LATENT, 0:H_VAE].astype(_BF16)   # (8, 32)
    br = w_ref[R_BIAS:R_BIAS + 1, :]                           # (1, 128) f32
    be1 = br[:, L_BE1:L_BE1 + H_VAE]
    b2122 = br[:, L_B2122:L_B2122 + 2 * LATENT]
    bd1 = br[:, L_BD1:L_BD1 + H_VAE]
    bd2 = br[:, L_BD2:L_BD2 + N_SAN]

    h1e = jnp.maximum(mm(feat, we1) + be1, 0.0)                # (BP, 32)
    ml = mm(h1e, w2122) + b2122                                # (BP, 16): [mu | logvar]
    mu = ml[:, :LATENT]
    logvar = ml[:, LATENT:]

    std = jnp.exp(0.5 * logvar)                                # f32 transcendentals
    z = mu + eps_ref[...] * std

    var = jnp.exp(logvar)
    kl = 0.5 * jnp.sum(var + mu * mu - logvar - 1.0, axis=-1, keepdims=True)   # (BP, 1)

    h3 = jnp.maximum(mm(z, wd1) + bd1, 0.0)                    # (BP, 32)
    dec = mm(h3, wd2) + bd2                                    # (BP, 16)

    # ---- one lane-dense (BP, 128) output slab: [z | dec | kl(x8) | zeros] ----
    kl_rep = jnp.broadcast_to(kl, (BP, LATENT))
    pad = jnp.zeros((BP, 128 - (LATENT + N_SAN + LATENT)), jnp.float32)
    out_ref[...] = jnp.concatenate([z, dec, kl_rep, pad], axis=-1)


# ---------------------------------------------------------------------------
# Parameter init (deterministic, PyTorch-style uniform ranges)
# ---------------------------------------------------------------------------
def init_params(key):
    keys = jax.random.split(key, 32)
    ki = iter(keys)

    def unif(k, shape, bound):
        return jax.random.uniform(k, shape, _F32, minval=-bound, maxval=bound)

    p = {}
    bnd = 1.0 / math.sqrt(H_RNN)
    p["wih0"] = unif(next(ki), (4 * H_RNN, D_IN), bnd)
    p["whh0"] = unif(next(ki), (4 * H_RNN, H_RNN), bnd)
    p["bih0"] = unif(next(ki), (4 * H_RNN,), bnd)
    p["bhh0"] = unif(next(ki), (4 * H_RNN,), bnd)
    p["wih1"] = unif(next(ki), (4 * H_RNN, H_RNN), bnd)
    p["whh1"] = unif(next(ki), (4 * H_RNN, H_RNN), bnd)
    p["bih1"] = unif(next(ki), (4 * H_RNN,), bnd)
    p["bhh1"] = unif(next(ki), (4 * H_RNN,), bnd)

    def linear(k1, k2, out_f, in_f):
        b = 1.0 / math.sqrt(in_f)
        return unif(k1, (out_f, in_f), b), unif(k2, (out_f,), b)

    p["we1"], p["be1"] = linear(next(ki), next(ki), H_VAE, H_RNN)     # vae_encoder_fc1
    p["w21"], p["b21"] = linear(next(ki), next(ki), LATENT, H_VAE)    # vae_encoder_fc21
    p["w22"], p["b22"] = linear(next(ki), next(ki), LATENT, H_VAE)    # vae_encoder_fc22
    p["wd1"], p["bd1"] = linear(next(ki), next(ki), H_VAE, LATENT)    # vae_decoder_fc1
    p["wd2"], p["bd2"] = linear(next(ki), next(ki), N_SAN, H_VAE)     # vae_decoder_fc2
    return p


# ---------------------------------------------------------------------------
# Weight packing (done ONCE, outside jit): one lane-dense (176, 128) f32 slab.
# Weights transposed to (in, out); LSTM gate columns permuted [i,f,g,o]->[i,f,o,g];
# the two LSTM biases folded (bih + bhh); layer-1 ih/hh weights pre-concatenated.
# ---------------------------------------------------------------------------
def pack_params(p):
    def reorder(w_t):   # (rows, 4H) with column blocks [i,f,g,o] -> [i,f,o,g]
        i, f, g, o = jnp.split(w_t, 4, axis=1)
        return jnp.concatenate([i, f, o, g], axis=1)

    def pad_rows(a, rows):
        return jnp.pad(a, ((0, rows - a.shape[0]), (0, 0)))

    wih0 = reorder(p["wih0"].T.astype(_F32))                              # (16, 128)
    whh0 = reorder(p["whh0"].T.astype(_F32))                              # (32, 128)
    b0 = reorder((p["bih0"] + p["bhh0"]).reshape(1, -1).astype(_F32))     # (1, 128)
    wih1 = reorder(p["wih1"].T.astype(_F32))                              # (32, 128)
    whh1 = reorder(p["whh1"].T.astype(_F32))                              # (32, 128)
    b1 = reorder((p["bih1"] + p["bhh1"]).reshape(1, -1).astype(_F32))     # (1, 128)

    lstm_slab = jnp.concatenate(
        [wih0, whh0, pad_rows(b0, 8), wih1, whh1, pad_rows(b1, 8)], axis=0)   # (128, 128)

    vae_w = jnp.concatenate(
        [p["we1"].T, p["w21"].T, p["w22"].T, p["wd2"].T], axis=1).astype(_F32)  # (32, 64)
    vae_w = jnp.pad(vae_w, ((0, 0), (0, 128 - vae_w.shape[1])))                 # (32, 128)

    wd1 = jnp.pad(p["wd1"].T.astype(_F32), ((0, 0), (0, 128 - H_VAE)))          # (8, 128)

    bias = jnp.concatenate(
        [p["be1"], p["b21"], p["b22"], p["bd1"], p["bd2"]]).reshape(1, -1).astype(_F32)
    bias = jnp.pad(bias, ((0, 7), (0, 128 - bias.shape[1])))                    # (8, 128)

    slab = jnp.concatenate([lstm_slab, vae_w, wd1, bias], axis=0)
    assert slab.shape == (SLAB_ROWS, 128)
    return slab


# ---------------------------------------------------------------------------
# Wrapper
# ---------------------------------------------------------------------------
@jax.jit
def s2one_forward(x, eps, wslab):
    bsz = x.shape[0]
    # batch-first -> time-major, pad batch to BP=8 (sublane tile), flatten time*batch.
    x_tm = jnp.transpose(x, (1, 0, 2)).astype(_F32)            # (T, B, D)
    x_tm = jnp.pad(x_tm, ((0, 0), (0, BP - bsz), (0, 0)))      # (T, BP, D)
    x_flat = x_tm.reshape(T * BP, D_IN)
    eps_p = jnp.pad(eps.astype(_F32), ((0, BP - bsz), (0, 0)))  # (BP, LATENT)

    vmem = pl.BlockSpec(memory_space=pltpu.MemorySpace.VMEM)
    out = pl.pallas_call(
        s2one_kernel,
        out_shape=jax.ShapeDtypeStruct((BP, 128), _F32),
        in_specs=[vmem, vmem, vmem],
        out_specs=vmem,
    )(x_flat, eps_p, wslab)

    z = out[:bsz, O_Z:O_Z + LATENT]
    dec = out[:bsz, O_DEC:O_DEC + N_SAN]
    kl = out[:bsz, O_KL]
    return z, dec, kl


# ---------------------------------------------------------------------------
# Pure-JAX reference (f32, HIGHEST precision) for sanity checking
# ---------------------------------------------------------------------------
def s2one_reference(x, eps, p):
    hp = jax.lax.Precision.HIGHEST

    def dot(a, b):
        return jnp.dot(a, b, precision=hp)

    def lstm_layer(seq, wih, whh, bih, bhh):
        hdim = whh.shape[1]
        h = jnp.zeros((seq.shape[0], hdim), _F32)
        c = jnp.zeros((seq.shape[0], hdim), _F32)
        outs = []
        for t in range(seq.shape[1]):
            g = dot(seq[:, t, :], wih.T) + dot(h, whh.T) + bih + bhh
            i = jax.nn.sigmoid(g[:, 0 * hdim:1 * hdim])
            f = jax.nn.sigmoid(g[:, 1 * hdim:2 * hdim])
            gg = jnp.tanh(g[:, 2 * hdim:3 * hdim])
            o = jax.nn.sigmoid(g[:, 3 * hdim:4 * hdim])
            c = f * c + i * gg
            h = o * jnp.tanh(c)
            outs.append(h)
        return jnp.stack(outs, axis=1)

    out0 = lstm_layer(x, p["wih0"], p["whh0"], p["bih0"], p["bhh0"])
    out1 = lstm_layer(out0, p["wih1"], p["whh1"], p["bih1"], p["bhh1"])
    feat = out1[:, -1, :]

    h1 = jax.nn.relu(dot(feat, p["we1"].T) + p["be1"])
    mu = dot(h1, p["w21"].T) + p["b21"]
    logvar = dot(h1, p["w22"].T) + p["b22"]
    z = mu + eps * jnp.exp(0.5 * logvar)
    kl = 0.5 * jnp.sum(jnp.exp(logvar) + mu ** 2 - logvar - 1.0, axis=-1)
    h3 = jax.nn.relu(dot(z, p["wd1"].T) + p["bd1"])
    dec = dot(h3, p["wd2"].T) + p["bd2"]
    return z, dec, kl


if __name__ == "__main__":
    key = jax.random.PRNGKey(0)
    k_x, k_eps, k_par = jax.random.split(key, 3)

    x = jax.random.normal(k_x, (B, T, D_IN), _F32)
    eps = jax.random.normal(k_eps, (B, LATENT), _F32)   # torch.randn_like(std) surrogate
    params = init_params(k_par)
    wslab = pack_params(params)                          # packed once, outside jit

    z, dec, kl = s2one_forward(x, eps, wslab)
    jax.block_until_ready((z, dec, kl))

    z_r, dec_r, kl_r = s2one_reference(x, eps, params)
    assert z.shape == (B, LATENT) and dec.shape == (B, N_SAN) and kl.shape == (B,)
    # Kernel matmuls run bf16-in / f32-accumulate on the MXU; reference is f32 HIGHEST,
    # so compare at bf16-appropriate tolerances (real bugs produce O(0.3+) errors).
    assert jnp.allclose(z, z_r, atol=5e-2, rtol=5e-2)
    assert jnp.allclose(dec, dec_r, atol=5e-2, rtol=5e-2)
    assert jnp.allclose(kl, kl_r, atol=5e-2, rtol=5e-2)

    print("KERNEL_OK")
</pallas_src>

<mosaic_0001>
module attributes {stable_mosaic.version = 11 : i64} {
  func.func @s2one_kernel(%arg0: memref<64x16xf32, #tpu.memory_space<vmem>>, %arg1: memref<8x8xf32, #tpu.memory_space<vmem>>, %arg2: memref<176x128xf32, #tpu.memory_space<vmem>>, %arg3: memref<8x128xf32, #tpu.memory_space<vmem>>) attributes {dimension_semantics = [], scalar_prefetch = 0 : i64, scratch_operands = 0 : i64, tpu.core_type = #tpu.core_type<tc>} {
    %c0 = arith.constant 0 : index
    %c0_0 = arith.constant 0 : index
    %0 = vector.load %arg2[%c0, %c0_0] : memref<176x128xf32, #tpu.memory_space<vmem>>, vector<16x128xf32>
    %1 = arith.truncf %0 : vector<16x128xf32> to vector<16x128xbf16>
    %c16 = arith.constant 16 : index
    %c0_1 = arith.constant 0 : index
    %2 = vector.load %arg2[%c16, %c0_1] : memref<176x128xf32, #tpu.memory_space<vmem>>, vector<32x128xf32>
    %3 = arith.truncf %2 : vector<32x128xf32> to vector<32x128xbf16>
    %c48 = arith.constant 48 : index
    %c0_2 = arith.constant 0 : index
    %4 = vector.load %arg2[%c48, %c0_2] : memref<176x128xf32, #tpu.memory_space<vmem>>, vector<1x128xf32>
    %c56 = arith.constant 56 : index
    %c0_3 = arith.constant 0 : index
    %5 = vector.load %arg2[%c56, %c0_3] : memref<176x128xf32, #tpu.memory_space<vmem>>, vector<64x128xf32>
    %6 = arith.truncf %5 : vector<64x128xf32> to vector<64x128xbf16>
    %c120 = arith.constant 120 : index
    %c0_4 = arith.constant 0 : index
    %7 = vector.load %arg2[%c120, %c0_4] : memref<176x128xf32, #tpu.memory_space<vmem>>, vector<1x128xf32>
    %c0_5 = arith.constant 0 : index
    %c0_6 = arith.constant 0 : index
    %8 = vector.load %arg0[%c0_5, %c0_6] : memref<64x16xf32, #tpu.memory_space<vmem>>, vector<64x16xf32>
    %9 = arith.truncf %8 : vector<64x16xf32> to vector<64x16xbf16>
    %cst = arith.constant dense<0.000000e+00> : vector<64x128xf32>
    %10 = tpu.matmul %9, %1, %cst {dimension_numbers = #tpu.dot_dimension_numbers<[1], [0], [0], [1], [0, 0, 1, 1], [], []>} : vector<64x16xbf16>, vector<16x128xbf16>, vector<64x128xf32> -> vector<64x128xf32>
    %11 = vector.broadcast %4 : vector<1x128xf32> to vector<64x128xf32>
    %12 = arith.addf %10, %11 : vector<64x128xf32>
    %cst_7 = arith.constant 0.000000e+00 : f32
    %13 = vector.broadcast %cst_7 : f32 to vector<8x32xf32>
    %14 = vector.extract_strided_slice %12 {offsets = [0, 0], sizes = [8, 128], strides = [1, 1]} : vector<64x128xf32> to vector<8x128xf32>
    %15 = arith.truncf %13 : vector<8x32xf32> to vector<8x32xbf16>
    %cst_8 = arith.constant dense<0.000000e+00> : vector<8x128xf32>
    %16 = tpu.matmul %15, %3, %cst_8 {dimension_numbers = #tpu.dot_dimension_numbers<[1], [0], [0], [1], [0, 0, 1, 1], [], []>} : vector<8x32xbf16>, vector<32x128xbf16>, vector<8x128xf32> -> vector<8x128xf32>
    %17 = arith.addf %14, %16 : vector<8x128xf32>
    %18 = vector.extract_strided_slice %17 {offsets = [0, 0], sizes = [8, 96], strides = [1, 1]} : vector<8x128xf32> to vector<8x96xf32>
    %19 = arith.negf %18 : vector<8x96xf32>
    %20 = math.exp %19 : vector<8x96xf32>
    %cst_9 = arith.constant 1.000000e+00 : f32
    %21 = vector.broadcast %cst_9 : f32 to vector<8x96xf32>
    %22 = arith.addf %21, %20 : vector<8x96xf32>
    %23 = arith.divf %21, %22 : vector<8x96xf32>
    %24 = vector.extract_strided_slice %17 {offsets = [0, 96], sizes = [8, 32], strides = [1, 1]} : vector<8x128xf32> to vector<8x32xf32>
    %25 = math.tanh %24 : vector<8x32xf32>
    %26 = vector.extract_strided_slice %23 {offsets = [0, 0], sizes = [8, 32], strides = [1, 1]} : vector<8x96xf32> to vector<8x32xf32>
    %27 = vector.extract_strided_slice %23 {offsets = [0, 32], sizes = [8, 32], strides = [1, 1]} : vector<8x96xf32> to vector<8x32xf32>
    %28 = vector.extract_strided_slice %23 {offsets = [0, 64], sizes = [8, 32], strides = [1, 1]} : vector<8x96xf32> to vector<8x32xf32>
    %29 = arith.mulf %27, %13 : vector<8x32xf32>
    %30 = arith.mulf %26, %25 : vector<8x32xf32>
    %31 = arith.addf %29, %30 : vector<8x32xf32>
    %32 = math.tanh %31 : vector<8x32xf32>
    %33 = arith.mulf %28, %32 : vector<8x32xf32>
    %34 = tpu.concatenate %33, %13 in 1 : vector<8x32xf32>, vector<8x32xf32> -> vector<8x64xf32>
    %35 = arith.truncf %34 : vector<8x64xf32> to vector<8x64xbf16>
    %cst_10 = arith.constant dense<0.000000e+00> : vector<8x128xf32>
    %36 = tpu.matmul %35, %6, %cst_10 {dimension_numbers = #tpu.dot_dimension_numbers<[1], [0], [0], [1], [0, 0, 1, 1], [], []>} : vector<8x64xbf16>, vector<64x128xbf16>, vector<8x128xf32> -> vector<8x128xf32>
    %37 = vector.broadcast %7 : vector<1x128xf32> to vector<8x128xf32>
    %38 = arith.addf %36, %37 : vector<8x128xf32>
    %39 = vector.extract_strided_slice %38 {offsets = [0, 0], sizes = [8, 96], strides = [1, 1]} : vector<8x128xf32> to vector<8x96xf32>
    %40 = arith.negf %39 : vector<8x96xf32>
    %41 = math.exp %40 : vector<8x96xf32>
    %cst_11 = arith.constant 1.000000e+00 : f32
    %42 = vector.broadcast %cst_11 : f32 to vector<8x96xf32>
    %43 = arith.addf %42, %41 : vector<8x96xf32>
    %44 = arith.divf %42, %43 : vector<8x96xf32>
    %45 = vector.extract_strided_slice %38 {offsets = [0, 96], sizes = [8, 32], strides = [1, 1]} : vector<8x128xf32> to vector<8x32xf32>
    %46 = math.tanh %45 : vector<8x32xf32>
    %47 = vector.extract_strided_slice %44 {offsets = [0, 0], sizes = [8, 32], strides = [1, 1]} : vector<8x96xf32> to vector<8x32xf32>
    %48 = vector.extract_strided_slice %44 {offsets = [0, 32], sizes = [8, 32], strides = [1, 1]} : vector<8x96xf32> to vector<8x32xf32>
    %49 = vector.extract_strided_slice %44 {offsets = [0, 64], sizes = [8, 32], strides = [1, 1]} : vector<8x96xf32> to vector<8x32xf32>
    %50 = arith.mulf %48, %13 : vector<8x32xf32>
    %51 = arith.mulf %47, %46 : vector<8x32xf32>
    %52 = arith.addf %50, %51 : vector<8x32xf32>
    %53 = math.tanh %52 : vector<8x32xf32>
    %54 = arith.mulf %49, %53 : vector<8x32xf32>
    %55 = vector.extract_strided_slice %12 {offsets = [8, 0], sizes = [8, 128], strides = [1, 1]} : vector<64x128xf32> to vector<8x128xf32>
    %56 = arith.truncf %33 : vector<8x32xf32> to vector<8x32xbf16>
    %cst_12 = arith.constant dense<0.000000e+00> : vector<8x128xf32>
    %57 = tpu.matmul %56, %3, %cst_12 {dimension_numbers = #tpu.dot_dimension_numbers<[1], [0], [0], [1], [0, 0, 1, 1], [], []>} : vector<8x32xbf16>, vector<32x128xbf16>, vector<8x128xf32> -> vector<8x128xf32>
    %58 = arith.addf %55, %57 : vector<8x128xf32>
    %59 = vector.extract_strided_slice %58 {offsets = [0, 0], sizes = [8, 96], strides = [1, 1]} : vector<8x128xf32> to vector<8x96xf32>
    %60 = arith.negf %59 : vector<8x96xf32>
    %61 = math.exp %60 : vector<8x96xf32>
    %cst_13 = arith.constant 1.000000e+00 : f32
    %62 = vector.broadcast %cst_13 : f32 to vector<8x96xf32>
    %63 = arith.addf %62, %61 : vector<8x96xf32>
    %64 = arith.divf %62, %63 : vector<8x96xf32>
    %65 = vector.extract_strided_slice %58 {offsets = [0, 96], sizes = [8, 32], strides = [1, 1]} : vector<8x128xf32> to vector<8x32xf32>
    %66 = math.tanh %65 : vector<8x32xf32>
    %67 = vector.extract_strided_slice %64 {offsets = [0, 0], sizes = [8, 32], strides = [1, 1]} : vector<8x96xf32> to vector<8x32xf32>
    %68 = vector.extract_strided_slice %64 {offsets = [0, 32], sizes = [8, 32], strides = [1, 1]} : vector<8x96xf32> to vector<8x32xf32>
    %69 = vector.extract_strided_slice %64 {offsets = [0, 64], sizes = [8, 32], strides = [1, 1]} : vector<8x96xf32> to vector<8x32xf32>
    %70 = arith.mulf %68, %31 : vector<8x32xf32>
    %71 = arith.mulf %67, %66 : vector<8x32xf32>
    %72 = arith.addf %70, %71 : vector<8x32xf32>
    %73 = math.tanh %72 : vector<8x32xf32>
    %74 = arith.mulf %69, %73 : vector<8x32xf32>
    %75 = tpu.concatenate %74, %54 in 1 : vector<8x32xf32>, vector<8x32xf32> -> vector<8x64xf32>
    %76 = arith.truncf %75 : vector<8x64xf32> to vector<8x64xbf16>
    %cst_14 = arith.constant dense<0.000000e+00> : vector<8x128xf32>
    %77 = tpu.matmul %76, %6, %cst_14 {dimension_numbers = #tpu.dot_dimension_numbers<[1], [0], [0], [1], [0, 0, 1, 1], [], []>} : vector<8x64xbf16>, vector<64x128xbf16>, vector<8x128xf32> -> vector<8x128xf32>
    %78 = vector.broadcast %7 : vector<1x128xf32> to vector<8x128xf32>
    %79 = arith.addf %77, %78 : vector<8x128xf32>
    %80 = vector.extract_strided_slice %79 {offsets = [0, 0], sizes = [8, 96], strides = [1, 1]} : vector<8x128xf32> to vector<8x96xf32>
    %81 = arith.negf %80 : vector<8x96xf32>
    %82 = math.exp %81 : vector<8x96xf32>
    %cst_15 = arith.constant 1.000000e+00 : f32
    %83 = vector.broadcast %cst_15 : f32 to vector<8x96xf32>
    %84 = arith.addf %83, %82 : vector<8x96xf32>
    %85 = arith.divf %83, %84 : vector<8x96xf32>
    %86 = vector.extract_strided_slice %79 {offsets = [0, 96], sizes = [8, 32], strides = [1, 1]} : vector<8x128xf32> to vector<8x32xf32>
    %87 = math.tanh %86 : vector<8x32xf32>
    %88 = vector.extract_strided_slice %85 {offsets = [0, 0], sizes = [8, 32], strides = [1, 1]} : vector<8x96xf32> to vector<8x32xf32>
    %89 = vector.extract_strided_slice %85 {offsets = [0, 32], sizes = [8, 32], strides = [1, 1]} : vector<8x96xf32> to vector<8x32xf32>
    %90 = vector.extract_strided_slice %85 {offsets = [0, 64], sizes = [8, 32], strides = [1, 1]} : vector<8x96xf32> to vector<8x32xf32>
    %91 = arith.mulf %89, %52 : vector<8x32xf32>
    %92 = arith.mulf %88, %87 : vector<8x32xf32>
    %93 = arith.addf %91, %92 : vector<8x32xf32>
    %94 = math.tanh %93 : vector<8x32xf32>
    %95 = arith.mulf %90, %94 : vector<8x32xf32>
    %96 = vector.extract_strided_slice %12 {offsets = [16, 0], sizes = [8, 128], strides = [1, 1]} : vector<64x128xf32> to vector<8x128xf32>
    %97 = arith.truncf %74 : vector<8x32xf32> to vector<8x32xbf16>
    %cst_16 = arith.constant dense<0.000000e+00> : vector<8x128xf32>
    %98 = tpu.matmul %97, %3, %cst_16 {dimension_numbers = #tpu.dot_dimension_numbers<[1], [0], [0], [1], [0, 0, 1, 1], [], []>} : vector<8x32xbf16>, vector<32x128xbf16>, vector<8x128xf32> -> vector<8x128xf32>
    %99 = arith.addf %96, %98 : vector<8x128xf32>
    %100 = vector.extract_strided_slice %99 {offsets = [0, 0], sizes = [8, 96], strides = [1, 1]} : vector<8x128xf32> to vector<8x96xf32>
    %101 = arith.negf %100 : vector<8x96xf32>
    %102 = math.exp %101 : vector<8x96xf32>
    %cst_17 = arith.constant 1.000000e+00 : f32
    %103 = vector.broadcast %cst_17 : f32 to vector<8x96xf32>
    %104 = arith.addf %103, %102 : vector<8x96xf32>
    %105 = arith.divf %103, %104 : vector<8x96xf32>
    %106 = vector.extract_strided_slice %99 {offsets = [0, 96], sizes = [8, 32], strides = [1, 1]} : vector<8x128xf32> to vector<8x32xf32>
    %107 = math.tanh %106 : vector<8x32xf32>
    %108 = vector.extract_strided_slice %105 {offsets = [0, 0], sizes = [8, 32], strides = [1, 1]} : vector<8x96xf32> to vector<8x32xf32>
    %109 = vector.extract_strided_slice %105 {offsets = [0, 32], sizes = [8, 32], strides = [1, 1]} : vector<8x96xf32> to vector<8x32xf32>
    %110 = vector.extract_strided_slice %105 {offsets = [0, 64], sizes = [8, 32], strides = [1, 1]} : vector<8x96xf32> to vector<8x32xf32>
    %111 = arith.mulf %109, %72 : vector<8x32xf32>
    %112 = arith.mulf %108, %107 : vector<8x32xf32>
    %113 = arith.addf %111, %112 : vector<8x32xf32>
    %114 = math.tanh %113 : vector<8x32xf32>
    %115 = arith.mulf %110, %114 : vector<8x32xf32>
    %116 = tpu.concatenate %115, %95 in 1 : vector<8x32xf32>, vector<8x32xf32> -> vector<8x64xf32>
    %117 = arith.truncf %116 : vector<8x64xf32> to vector<8x64xbf16>
    %cst_18 = arith.constant dense<0.000000e+00> : vector<8x128xf32>
    %118 = tpu.matmul %117, %6, %cst_18 {dimension_numbers = #tpu.dot_dimension_numbers<[1], [0], [0], [1], [0, 0, 1, 1], [], []>} : vector<8x64xbf16>, vector<64x128xbf16>, vector<8x128xf32> -> vector<8x128xf32>
    %119 = vector.broadcast %7 : vector<1x128xf32> to vector<8x128xf32>
    %120 = arith.addf %118, %119 : vector<8x128xf32>
    %121 = vector.extract_strided_slice %120 {offsets = [0, 0], sizes = [8, 96], strides = [1, 1]} : vector<8x128xf32> to vector<8x96xf32>
    %122 = arith.negf %121 : vector<8x96xf32>
    %123 = math.exp %122 : vector<8x96xf32>
    %cst_19 = arith.constant 1.000000e+00 : f32
    %124 = vector.broadcast %cst_19 : f32 to vector<8x96xf32>
    %125 = arith.addf %124, %123 : vector<8x96xf32>
    %126 = arith.divf %124, %125 : vector<8x96xf32>
    %127 = vector.extract_strided_slice %120 {offsets = [0, 96], sizes = [8, 32], strides = [1, 1]} : vector<8x128xf32> to vector<8x32xf32>
    %128 = math.tanh %127 : vector<8x32xf32>
    %129 = vector.extract_strided_slice %126 {offsets = [0, 0], sizes = [8, 32], strides = [1, 1]} : vector<8x96xf32> to vector<8x32xf32>
    %130 = vector.extract_strided_slice %126 {offsets = [0, 32], sizes = [8, 32], strides = [1, 1]} : vector<8x96xf32> to vector<8x32xf32>
    %131 = vector.extract_strided_slice %126 {offsets = [0, 64], sizes = [8, 32], strides = [1, 1]} : vector<8x96xf32> to vector<8x32xf32>
    %132 = arith.mulf %130, %93 : vector<8x32xf32>
    %133 = arith.mulf %129, %128 : vector<8x32xf32>
    %134 = arith.addf %132, %133 : vector<8x32xf32>
    %135 = math.tanh %134 : vector<8x32xf32>
    %136 = arith.mulf %131, %135 : vector<8x32xf32>
    %137 = vector.extract_strided_slice %12 {offsets = [24, 0], sizes = [8, 128], strides = [1, 1]} : vector<64x128xf32> to vector<8x128xf32>
    %138 = arith.truncf %115 : vector<8x32xf32> to vector<8x32xbf16>
    %cst_20 = arith.constant dense<0.000000e+00> : vector<8x128xf32>
    %139 = tpu.matmul %138, %3, %cst_20 {dimension_numbers = #tpu.dot_dimension_numbers<[1], [0], [0], [1], [0, 0, 1, 1], [], []>} : vector<8x32xbf16>, vector<32x128xbf16>, vector<8x128xf32> -> vector<8x128xf32>
    %140 = arith.addf %137, %139 : vector<8x128xf32>
    %141 = vector.extract_strided_slice %140 {offsets = [0, 0], sizes = [8, 96], strides = [1, 1]} : vector<8x128xf32> to vector<8x96xf32>
    %142 = arith.negf %141 : vector<8x96xf32>
    %143 = math.exp %142 : vector<8x96xf32>
    %cst_21 = arith.constant 1.000000e+00 : f32
    %144 = vector.broadcast %cst_21 : f32 to vector<8x96xf32>
    %145 = arith.addf %144, %143 : vector<8x96xf32>
    %146 = arith.divf %144, %145 : vector<8x96xf32>
    %147 = vector.extract_strided_slice %140 {offsets = [0, 96], sizes = [8, 32], strides = [1, 1]} : vector<8x128xf32> to vector<8x32xf32>
    %148 = math.tanh %147 : vector<8x32xf32>
    %149 = vector.extract_strided_slice %146 {offsets = [0, 0], sizes = [8, 32], strides = [1, 1]} : vector<8x96xf32> to vector<8x32xf32>
    %150 = vector.extract_strided_slice %146 {offsets = [0, 32], sizes = [8, 32], strides = [1, 1]} : vector<8x96xf32> to vector<8x32xf32>
    %151 = vector.extract_strided_slice %146 {offsets = [0, 64], sizes = [8, 32], strides = [1, 1]} : vector<8x96xf32> to vector<8x32xf32>
    %152 = arith.mulf %150, %113 : vector<8x32xf32>
    %153 = arith.mulf %149, %148 : vector<8x32xf32>
    %154 = arith.addf %152, %153 : vector<8x32xf32>
    %155 = math.tanh %154 : vector<8x32xf32>
    %156 = arith.mulf %151, %155 : vector<8x32xf32>
    %157 = tpu.concatenate %156, %136 in 1 : vector<8x32xf32>, vector<8x32xf32> -> vector<8x64xf32>
    %158 = arith.truncf %157 : vector<8x64xf32> to vector<8x64xbf16>
    %cst_22 = arith.constant dense<0.000000e+00> : vector<8x128xf32>
    %159 = tpu.matmul %158, %6, %cst_22 {dimension_numbers = #tpu.dot_dimension_numbers<[1], [0], [0], [1], [0, 0, 1, 1], [], []>} : vector<8x64xbf16>, vector<64x128xbf16>, vector<8x128xf32> -> vector<8x128xf32>
    %160 = vector.broadcast %7 : vector<1x128xf32> to vector<8x128xf32>
    %161 = arith.addf %159, %160 : vector<8x128xf32>
    %162 = vector.extract_strided_slice %161 {offsets = [0, 0], sizes = [8, 96], strides = [1, 1]} : vector<8x128xf32> to vector<8x96xf32>
    %163 = arith.negf %162 : vector<8x96xf32>
    %164 = math.exp %163 : vector<8x96xf32>
    %cst_23 = arith.constant 1.000000e+00 : f32
    %165 = vector.broadcast %cst_23 : f32 to vector<8x96xf32>
    %166 = arith.addf %165, %164 : vector<8x96xf32>
    %167 = arith.divf %165, %166 : vector<8x96xf32>
    %168 = vector.extract_strided_slice %161 {offsets = [0, 96], sizes = [8, 32], strides = [1, 1]} : vector<8x128xf32> to vector<8x32xf32>
    %169 = math.tanh %168 : vector<8x32xf32>
    %170 = vector.extract_strided_slice %167 {offsets = [0, 0], sizes = [8, 32], strides = [1, 1]} : vector<8x96xf32> to vector<8x32xf32>
    %171 = vector.extract_strided_slice %167 {offsets = [0, 32], sizes = [8, 32], strides = [1, 1]} : vector<8x96xf32> to vector<8x32xf32>
    %172 = vector.extract_strided_slice %167 {offsets = [0, 64], sizes = [8, 32], strides = [1, 1]} : vector<8x96xf32> to vector<8x32xf32>
    %173 = arith.mulf %171, %134 : vector<8x32xf32>
    %174 = arith.mulf %170, %169 : vector<8x32xf32>
    %175 = arith.addf %173, %174 : vector<8x32xf32>
    %176 = math.tanh %175 : vector<8x32xf32>
    %177 = arith.mulf %172, %176 : vector<8x32xf32>
    %178 = vector.extract_strided_slice %12 {offsets = [32, 0], sizes = [8, 128], strides = [1, 1]} : vector<64x128xf32> to vector<8x128xf32>
    %179 = arith.truncf %156 : vector<8x32xf32> to vector<8x32xbf16>
    %cst_24 = arith.constant dense<0.000000e+00> : vector<8x128xf32>
    %180 = tpu.matmul %179, %3, %cst_24 {dimension_numbers = #tpu.dot_dimension_numbers<[1], [0], [0], [1], [0, 0, 1, 1], [], []>} : vector<8x32xbf16>, vector<32x128xbf16>, vector<8x128xf32> -> vector<8x128xf32>
    %181 = arith.addf %178, %180 : vector<8x128xf32>
    %182 = vector.extract_strided_slice %181 {offsets = [0, 0], sizes = [8, 96], strides = [1, 1]} : vector<8x128xf32> to vector<8x96xf32>
    %183 = arith.negf %182 : vector<8x96xf32>
    %184 = math.exp %183 : vector<8x96xf32>
    %cst_25 = arith.constant 1.000000e+00 : f32
    %185 = vector.broadcast %cst_25 : f32 to vector<8x96xf32>
    %186 = arith.addf %185, %184 : vector<8x96xf32>
    %187 = arith.divf %185, %186 : vector<8x96xf32>
    %188 = vector.extract_strided_slice %181 {offsets = [0, 96], sizes = [8, 32], strides = [1, 1]} : vector<8x128xf32> to vector<8x32xf32>
    %189 = math.tanh %188 : vector<8x32xf32>
    %190 = vector.extract_strided_slice %187 {offsets = [0, 0], sizes = [8, 32], strides = [1, 1]} : vector<8x96xf32> to vector<8x32xf32>
    %191 = vector.extract_strided_slice %187 {offsets = [0, 32], sizes = [8, 32], strides = [1, 1]} : vector<8x96xf32> to vector<8x32xf32>
    %192 = vector.extract_strided_slice %187 {offsets = [0, 64], sizes = [8, 32], strides = [1, 1]} : vector<8x96xf32> to vector<8x32xf32>
    %193 = arith.mulf %191, %154 : vector<8x32xf32>
    %194 = arith.mulf %190, %189 : vector<8x32xf32>
    %195 = arith.addf %193, %194 : vector<8x32xf32>
    %196 = math.tanh %195 : vector<8x32xf32>
    %197 = arith.mulf %192, %196 : vector<8x32xf32>
    %198 = tpu.concatenate %197, %177 in 1 : vector<8x32xf32>, vector<8x32xf32> -> vector<8x64xf32>
    %199 = arith.truncf %198 : vector<8x64xf32> to vector<8x64xbf16>
    %cst_26 = arith.constant dense<0.000000e+00> : vector<8x128xf32>
    %200 = tpu.matmul %199, %6, %cst_26 {dimension_numbers = #tpu.dot_dimension_numbers<[1], [0], [0], [1], [0, 0, 1, 1], [], []>} : vector<8x64xbf16>, vector<64x128xbf16>, vector<8x128xf32> -> vector<8x128xf32>
    %201 = vector.broadcast %7 : vector<1x128xf32> to vector<8x128xf32>
    %202 = arith.addf %200, %201 : vector<8x128xf32>
    %203 = vector.extract_strided_slice %202 {offsets = [0, 0], sizes = [8, 96], strides = [1, 1]} : vector<8x128xf32> to vector<8x96xf32>
    %204 = arith.negf %203 : vector<8x96xf32>
    %205 = math.exp %204 : vector<8x96xf32>
    %cst_27 = arith.constant 1.000000e+00 : f32
    %206 = vector.broadcast %cst_27 : f32 to vector<8x96xf32>
    %207 = arith.addf %206, %205 : vector<8x96xf32>
    %208 = arith.divf %206, %207 : vector<8x96xf32>
    %209 = vector.extract_strided_slice %202 {offsets = [0, 96], sizes = [8, 32], strides = [1, 1]} : vector<8x128xf32> to vector<8x32xf32>
    %210 = math.tanh %209 : vector<8x32xf32>
    %211 = vector.extract_strided_slice %208 {offsets = [0, 0], sizes = [8, 32], strides = [1, 1]} : vector<8x96xf32> to vector<8x32xf32>
    %212 = vector.extract_strided_slice %208 {offsets = [0, 32], sizes = [8, 32], strides = [1, 1]} : vector<8x96xf32> to vector<8x32xf32>
    %213 = vector.extract_strided_slice %208 {offsets = [0, 64], sizes = [8, 32], strides = [1, 1]} : vector<8x96xf32> to vector<8x32xf32>
    %214 = arith.mulf %212, %175 : vector<8x32xf32>
    %215 = arith.mulf %211, %210 : vector<8x32xf32>
    %216 = arith.addf %214, %215 : vector<8x32xf32>
    %217 = math.tanh %216 : vector<8x32xf32>
    %218 = arith.mulf %213, %217 : vector<8x32xf32>
    %219 = vector.extract_strided_slice %12 {offsets = [40, 0], sizes = [8, 128], strides = [1, 1]} : vector<64x128xf32> to vector<8x128xf32>
    %220 = arith.truncf %197 : vector<8x32xf32> to vector<8x32xbf16>
    %cst_28 = arith.constant dense<0.000000e+00> : vector<8x128xf32>
    %221 = tpu.matmul %220, %3, %cst_28 {dimension_numbers = #tpu.dot_dimension_numbers<[1], [0], [0], [1], [0, 0, 1, 1], [], []>} : vector<8x32xbf16>, vector<32x128xbf16>, vector<8x128xf32> -> vector<8x128xf32>
    %222 = arith.addf %219, %221 : vector<8x128xf32>
    %223 = vector.extract_strided_slice %222 {offsets = [0, 0], sizes = [8, 96], strides = [1, 1]} : vector<8x128xf32> to vector<8x96xf32>
    %224 = arith.negf %223 : vector<8x96xf32>
    %225 = math.exp %224 : vector<8x96xf32>
    %cst_29 = arith.constant 1.000000e+00 : f32
    %226 = vector.broadcast %cst_29 : f32 to vector<8x96xf32>
    %227 = arith.addf %226, %225 : vector<8x96xf32>
    %228 = arith.divf %226, %227 : vector<8x96xf32>
    %229 = vector.extract_strided_slice %222 {offsets = [0, 96], sizes = [8, 32], strides = [1, 1]} : vector<8x128xf32> to vector<8x32xf32>
    %230 = math.tanh %229 : vector<8x32xf32>
    %231 = vector.extract_strided_slice %228 {offsets = [0, 0], sizes = [8, 32], strides = [1, 1]} : vector<8x96xf32> to vector<8x32xf32>
    %232 = vector.extract_strided_slice %228 {offsets = [0, 32], sizes = [8, 32], strides = [1, 1]} : vector<8x96xf32> to vector<8x32xf32>
    %233 = vector.extract_strided_slice %228 {offsets = [0, 64], sizes = [8, 32], strides = [1, 1]} : vector<8x96xf32> to vector<8x32xf32>
    %234 = arith.mulf %232, %195 : vector<8x32xf32>
    %235 = arith.mulf %231, %230 : vector<8x32xf32>
    %236 = arith.addf %234, %235 : vector<8x32xf32>
    %237 = math.tanh %236 : vector<8x32xf32>
    %238 = arith.mulf %233, %237 : vector<8x32xf32>
    %239 = tpu.concatenate %238, %218 in 1 : vector<8x32xf32>, vector<8x32xf32> -> vector<8x64xf32>
    %240 = arith.truncf %239 : vector<8x64xf32> to vector<8x64xbf16>
    %cst_30 = arith.constant dense<0.000000e+00> : vector<8x128xf32>
    %241 = tpu.matmul %240, %6, %cst_30 {dimension_numbers = #tpu.dot_dimension_numbers<[1], [0], [0], [1], [0, 0, 1, 1], [], []>} : vector<8x64xbf16>, vector<64x128xbf16>, vector<8x128xf32> -> vector<8x128xf32>
    %242 = vector.broadcast %7 : vector<1x128xf32> to vector<8x128xf32>
    %243 = arith.addf %241, %242 : vector<8x128xf32>
    %244 = vector.extract_strided_slice %243 {offsets = [0, 0], sizes = [8, 96], strides = [1, 1]} : vector<8x128xf32> to vector<8x96xf32>
    %245 = arith.negf %244 : vector<8x96xf32>
    %246 = math.exp %245 : vector<8x96xf32>
    %cst_31 = arith.constant 1.000000e+00 : f32
    %247 = vector.broadcast %cst_31 : f32 to vector<8x96xf32>
    %248 = arith.addf %247, %246 : vector<8x96xf32>
    %249 = arith.divf %247, %248 : vector<8x96xf32>
    %250 = vector.extract_strided_slice %243 {offsets = [0, 96], sizes = [8, 32], strides = [1, 1]} : vector<8x128xf32> to vector<8x32xf32>
    %251 = math.tanh %250 : vector<8x32xf32>
    %252 = vector.extract_strided_slice %249 {offsets = [0, 0], sizes = [8, 32], strides = [1, 1]} : vector<8x96xf32> to vector<8x32xf32>
    %253 = vector.extract_strided_slice %249 {offsets = [0, 32], sizes = [8, 32], strides = [1, 1]} : vector<8x96xf32> to vector<8x32xf32>
    %254 = vector.extract_strided_slice %249 {offsets = [0, 64], sizes = [8, 32], strides = [1, 1]} : vector<8x96xf32> to vector<8x32xf32>
    %255 = arith.mulf %253, %216 : vector<8x32xf32>
    %256 = arith.mulf %252, %251 : vector<8x32xf32>
    %257 = arith.addf %255, %256 : vector<8x32xf32>
    %258 = math.tanh %257 : vector<8x32xf32>
    %259 = arith.mulf %254, %258 : vector<8x32xf32>
    %260 = vector.extract_strided_slice %12 {offsets = [48, 0], sizes = [8, 128], strides = [1, 1]} : vector<64x128xf32> to vector<8x128xf32>
    %261 = arith.truncf %238 : vector<8x32xf32> to vector<8x32xbf16>
    %cst_32 = arith.constant dense<0.000000e+00> : vector<8x128xf32>
    %262 = tpu.matmul %261, %3, %cst_32 {dimension_numbers = #tpu.dot_dimension_numbers<[1], [0], [0], [1], [0, 0, 1, 1], [], []>} : vector<8x32xbf16>, vector<32x128xbf16>, vector<8x128xf32> -> vector<8x128xf32>
    %263 = arith.addf %260, %262 : vector<8x128xf32>
    %264 = vector.extract_strided_slice %263 {offsets = [0, 0], sizes = [8, 96], strides = [1, 1]} : vector<8x128xf32> to vector<8x96xf32>
    %265 = arith.negf %264 : vector<8x96xf32>
    %266 = math.exp %265 : vector<8x96xf32>
    %cst_33 = arith.constant 1.000000e+00 : f32
    %267 = vector.broadcast %cst_33 : f32 to vector<8x96xf32>
    %268 = arith.addf %267, %266 : vector<8x96xf32>
    %269 = arith.divf %267, %268 : vector<8x96xf32>
    %270 = vector.extract_strided_slice %263 {offsets = [0, 96], sizes = [8, 32], strides = [1, 1]} : vector<8x128xf32> to vector<8x32xf32>
    %271 = math.tanh %270 : vector<8x32xf32>
    %272 = vector.extract_strided_slice %269 {offsets = [0, 0], sizes = [8, 32], strides = [1, 1]} : vector<8x96xf32> to vector<8x32xf32>
    %273 = vector.extract_strided_slice %269 {offsets = [0, 32], sizes = [8, 32], strides = [1, 1]} : vector<8x96xf32> to vector<8x32xf32>
    %274 = vector.extract_strided_slice %269 {offsets = [0, 64], sizes = [8, 32], strides = [1, 1]} : vector<8x96xf32> to vector<8x32xf32>
    %275 = arith.mulf %273, %236 : vector<8x32xf32>
    %276 = arith.mulf %272, %271 : vector<8x32xf32>
    %277 = arith.addf %275, %276 : vector<8x32xf32>
    %278 = math.tanh %277 : vector<8x32xf32>
    %279 = arith.mulf %274, %278 : vector<8x32xf32>
    %280 = tpu.concatenate %279, %259 in 1 : vector<8x32xf32>, vector<8x32xf32> -> vector<8x64xf32>
    %281 = arith.truncf %280 : vector<8x64xf32> to vector<8x64xbf16>
    %cst_34 = arith.constant dense<0.000000e+00> : vector<8x128xf32>
    %282 = tpu.matmul %281, %6, %cst_34 {dimension_numbers = #tpu.dot_dimension_numbers<[1], [0], [0], [1], [0, 0, 1, 1], [], []>} : vector<8x64xbf16>, vector<64x128xbf16>, vector<8x128xf32> -> vector<8x128xf32>
    %283 = vector.broadcast %7 : vector<1x128xf32> to vector<8x128xf32>
    %284 = arith.addf %282, %283 : vector<8x128xf32>
    %285 = vector.extract_strided_slice %284 {offsets = [0, 0], sizes = [8, 96], strides = [1, 1]} : vector<8x128xf32> to vector<8x96xf32>
    %286 = arith.negf %285 : vector<8x96xf32>
    %287 = math.exp %286 : vector<8x96xf32>
    %cst_35 = arith.constant 1.000000e+00 : f32
    %288 = vector.broadcast %cst_35 : f32 to vector<8x96xf32>
    %289 = arith.addf %288, %287 : vector<8x96xf32>
    %290 = arith.divf %288, %289 : vector<8x96xf32>
    %291 = vector.extract_strided_slice %284 {offsets = [0, 96], sizes = [8, 32], strides = [1, 1]} : vector<8x128xf32> to vector<8x32xf32>
    %292 = math.tanh %291 : vector<8x32xf32>
    %293 = vector.extract_strided_slice %290 {offsets = [0, 0], sizes = [8, 32], strides = [1, 1]} : vector<8x96xf32> to vector<8x32xf32>
    %294 = vector.extract_strided_slice %290 {offsets = [0, 32], sizes = [8, 32], strides = [1, 1]} : vector<8x96xf32> to vector<8x32xf32>
    %295 = vector.extract_strided_slice %290 {offsets = [0, 64], sizes = [8, 32], strides = [1, 1]} : vector<8x96xf32> to vector<8x32xf32>
    %296 = arith.mulf %294, %257 : vector<8x32xf32>
    %297 = arith.mulf %293, %292 : vector<8x32xf32>
    %298 = arith.addf %296, %297 : vector<8x32xf32>
    %299 = math.tanh %298 : vector<8x32xf32>
    %300 = arith.mulf %295, %299 : vector<8x32xf32>
    %301 = vector.extract_strided_slice %12 {offsets = [56, 0], sizes = [8, 128], strides = [1, 1]} : vector<64x128xf32> to vector<8x128xf32>
    %302 = arith.truncf %279 : vector<8x32xf32> to vector<8x32xbf16>
    %cst_36 = arith.constant dense<0.000000e+00> : vector<8x128xf32>
    %303 = tpu.matmul %302, %3, %cst_36 {dimension_numbers = #tpu.dot_dimension_numbers<[1], [0], [0], [1], [0, 0, 1, 1], [], []>} : vector<8x32xbf16>, vector<32x128xbf16>, vector<8x128xf32> -> vector<8x128xf32>
    %304 = arith.addf %301, %303 : vector<8x128xf32>
    %305 = vector.extract_strided_slice %304 {offsets = [0, 0], sizes = [8, 96], strides = [1, 1]} : vector<8x128xf32> to vector<8x96xf32>
    %306 = arith.negf %305 : vector<8x96xf32>
    %307 = math.exp %306 : vector<8x96xf32>
    %cst_37 = arith.constant 1.000000e+00 : f32
    %308 = vector.broadcast %cst_37 : f32 to vector<8x96xf32>
    %309 = arith.addf %308, %307 : vector<8x96xf32>
    %310 = arith.divf %308, %309 : vector<8x96xf32>
    %311 = vector.extract_strided_slice %304 {offsets = [0, 96], sizes = [8, 32], strides = [1, 1]} : vector<8x128xf32> to vector<8x32xf32>
    %312 = math.tanh %311 : vector<8x32xf32>
    %313 = vector.extract_strided_slice %310 {offsets = [0, 0], sizes = [8, 32], strides = [1, 1]} : vector<8x96xf32> to vector<8x32xf32>
    %314 = vector.extract_strided_slice %310 {offsets = [0, 32], sizes = [8, 32], strides = [1, 1]} : vector<8x96xf32> to vector<8x32xf32>
    %315 = vector.extract_strided_slice %310 {offsets = [0, 64], sizes = [8, 32], strides = [1, 1]} : vector<8x96xf32> to vector<8x32xf32>
    %316 = arith.mulf %314, %277 : vector<8x32xf32>
    %317 = arith.mulf %313, %312 : vector<8x32xf32>
    %318 = arith.addf %316, %317 : vector<8x32xf32>
    %319 = math.tanh %318 : vector<8x32xf32>
    %320 = arith.mulf %315, %319 : vector<8x32xf32>
    %321 = tpu.concatenate %320, %300 in 1 : vector<8x32xf32>, vector<8x32xf32> -> vector<8x64xf32>
    %322 = arith.truncf %321 : vector<8x64xf32> to vector<8x64xbf16>
    %cst_38 = arith.constant dense<0.000000e+00> : vector<8x128xf32>
    %323 = tpu.matmul %322, %6, %cst_38 {dimension_numbers = #tpu.dot_dimension_numbers<[1], [0], [0], [1], [0, 0, 1, 1], [], []>} : vector<8x64xbf16>, vector<64x128xbf16>, vector<8x128xf32> -> vector<8x128xf32>
    %324 = vector.broadcast %7 : vector<1x128xf32> to vector<8x128xf32>
    %325 = arith.addf %323, %324 : vector<8x128xf32>
    %326 = vector.extract_strided_slice %325 {offsets = [0, 0], sizes = [8, 96], strides = [1, 1]} : vector<8x128xf32> to vector<8x96xf32>
    %327 = arith.negf %326 : vector<8x96xf32>
    %328 = math.exp %327 : vector<8x96xf32>
    %cst_39 = arith.constant 1.000000e+00 : f32
    %329 = vector.broadcast %cst_39 : f32 to vector<8x96xf32>
    %330 = arith.addf %329, %328 : vector<8x96xf32>
    %331 = arith.divf %329, %330 : vector<8x96xf32>
    %332 = vector.extract_strided_slice %325 {offsets = [0, 96], sizes = [8, 32], strides = [1, 1]} : vector<8x128xf32> to vector<8x32xf32>
    %333 = math.tanh %332 : vector<8x32xf32>
    %334 = vector.extract_strided_slice %331 {offsets = [0, 0], sizes = [8, 32], strides = [1, 1]} : vector<8x96xf32> to vector<8x32xf32>
    %335 = vector.extract_strided_slice %331 {offsets = [0, 32], sizes = [8, 32], strides = [1, 1]} : vector<8x96xf32> to vector<8x32xf32>
    %336 = vector.extract_strided_slice %331 {offsets = [0, 64], sizes = [8, 32], strides = [1, 1]} : vector<8x96xf32> to vector<8x32xf32>
    %337 = arith.mulf %335, %298 : vector<8x32xf32>
    %338 = arith.mulf %334, %333 : vector<8x32xf32>
    %339 = arith.addf %337, %338 : vector<8x32xf32>
    %340 = math.tanh %339 : vector<8x32xf32>
    %341 = arith.mulf %336, %340 : vector<8x32xf32>
    %c128 = arith.constant 128 : index
    %c0_40 = arith.constant 0 : index
    %342 = vector.load %arg2[%c128, %c0_40] : memref<176x128xf32, #tpu.memory_space<vmem>>, vector<32x128xf32>
    %343 = vector.extract_strided_slice %342 {offsets = [0, 0], sizes = [32, 32], strides = [1, 1]} : vector<32x128xf32> to vector<32x32xf32>
    %344 = arith.truncf %343 : vector<32x32xf32> to vector<32x32xbf16>
    %345 = vector.extract_strided_slice %342 {offsets = [0, 32], sizes = [32, 16], strides = [1, 1]} : vector<32x128xf32> to vector<32x16xf32>
    %346 = arith.truncf %345 : vector<32x16xf32> to vector<32x16xbf16>
    %347 = vector.extract_strided_slice %342 {offsets = [0, 48], sizes = [32, 16], strides = [1, 1]} : vector<32x128xf32> to vector<32x16xf32>
    %348 = arith.truncf %347 : vector<32x16xf32> to vector<32x16xbf16>
    %c160 = arith.constant 160 : index
    %c0_41 = arith.constant 0 : index
    %349 = vector.load %arg2[%c160, %c0_41] : memref<176x128xf32, #tpu.memory_space<vmem>>, vector<8x32xf32>
    %350 = arith.truncf %349 : vector<8x32xf32> to vector<8x32xbf16>
    %c168 = arith.constant 168 : index
    %c0_42 = arith.constant 0 : index
    %351 = vector.load %arg2[%c168, %c0_42] : memref<176x128xf32, #tpu.memory_space<vmem>>, vector<1x128xf32>
    %352 = vector.extract_strided_slice %351 {offsets = [0, 0], sizes = [1, 32], strides = [1, 1]} : vector<1x128xf32> to vector<1x32xf32>
    %353 = vector.extract_strided_slice %351 {offsets = [0, 32], sizes = [1, 16], strides = [1, 1]} : vector<1x128xf32> to vector<1x16xf32>
    %354 = vector.extract_strided_slice %351 {offsets = [0, 48], sizes = [1, 32], strides = [1, 1]} : vector<1x128xf32> to vector<1x32xf32>
    %355 = vector.extract_strided_slice %351 {offsets = [0, 80], sizes = [1, 16], strides = [1, 1]} : vector<1x128xf32> to vector<1x16xf32>
    %356 = arith.truncf %341 : vector<8x32xf32> to vector<8x32xbf16>
    %cst_43 = arith.constant dense<0.000000e+00> : vector<8x32xf32>
    %357 = tpu.matmul %356, %344, %cst_43 {dimension_numbers = #tpu.dot_dimension_numbers<[1], [0], [0], [1], [0, 0, 1, 1], [], []>} : vector<8x32xbf16>, vector<32x32xbf16>, vector<8x32xf32> -> vector<8x32xf32>
    %358 = vector.broadcast %352 : vector<1x32xf32> to vector<8x32xf32>
    %359 = arith.addf %357, %358 : vector<8x32xf32>
    %cst_44 = arith.constant 0.000000e+00 : f32
    %360 = vector.broadcast %cst_44 : f32 to vector<8x32xf32>
    %361 = arith.maximumf %359, %360 : vector<8x32xf32>
    %362 = arith.truncf %361 : vector<8x32xf32> to vector<8x32xbf16>
    %cst_45 = arith.constant dense<0.000000e+00> : vector<8x16xf32>
    %363 = tpu.matmul %362, %346, %cst_45 {dimension_numbers = #tpu.dot_dimension_numbers<[1], [0], [0], [1], [0, 0, 1, 1], [], []>} : vector<8x32xbf16>, vector<32x16xbf16>, vector<8x16xf32> -> vector<8x16xf32>
    %364 = vector.broadcast %353 : vector<1x16xf32> to vector<8x16xf32>
    %365 = arith.addf %363, %364 : vector<8x16xf32>
    %366 = vector.extract_strided_slice %365 {offsets = [0, 0], sizes = [8, 8], strides = [1, 1]} : vector<8x16xf32> to vector<8x8xf32>
    %367 = vector.extract_strided_slice %365 {offsets = [0, 8], sizes = [8, 8], strides = [1, 1]} : vector<8x16xf32> to vector<8x8xf32>
    %cst_46 = arith.constant 5.000000e-01 : f32
    %368 = vector.broadcast %cst_46 : f32 to vector<8x8xf32>
    %369 = arith.mulf %368, %367 : vector<8x8xf32>
    %370 = math.exp %369 : vector<8x8xf32>
    %c0_47 = arith.constant 0 : index
    %c0_48 = arith.constant 0 : index
    %371 = vector.load %arg1[%c0_47, %c0_48] : memref<8x8xf32, #tpu.memory_space<vmem>>, vector<8x8xf32>
    %372 = arith.mulf %371, %370 : vector<8x8xf32>
    %373 = arith.addf %366, %372 : vector<8x8xf32>
    %374 = math.exp %367 : vector<8x8xf32>
    %375 = arith.mulf %366, %366 : vector<8x8xf32>
    %376 = arith.addf %374, %375 : vector<8x8xf32>
    %377 = arith.subf %376, %367 : vector<8x8xf32>
    %cst_49 = arith.constant 1.000000e+00 : f32
    %378 = vector.broadcast %cst_49 : f32 to vector<8x8xf32>
    %379 = arith.subf %377, %378 : vector<8x8xf32>
    %cst_50 = arith.constant dense<0.000000e+00> : vector<8xf32>
    %380 = vector.multi_reduction <add>, %379, %cst_50 [1] : vector<8x8xf32> to vector<8xf32>
    %381 = vector.shape_cast %380 : vector<8xf32> to vector<8x1xf32>
    %cst_51 = arith.constant 5.000000e-01 : f32
    %382 = vector.broadcast %cst_51 : f32 to vector<8x1xf32>
    %383 = arith.mulf %382, %381 : vector<8x1xf32>
    %384 = arith.truncf %373 : vector<8x8xf32> to vector<8x8xbf16>
    %cst_52 = arith.constant dense<0.000000e+00> : vector<8x32xf32>
    %385 = tpu.matmul %384, %350, %cst_52 {dimension_numbers = #tpu.dot_dimension_numbers<[1], [0], [0], [1], [0, 0, 1, 1], [], []>} : vector<8x8xbf16>, vector<8x32xbf16>, vector<8x32xf32> -> vector<8x32xf32>
    %386 = vector.broadcast %354 : vector<1x32xf32> to vector<8x32xf32>
    %387 = arith.addf %385, %386 : vector<8x32xf32>
    %cst_53 = arith.constant 0.000000e+00 : f32
    %388 = vector.broadcast %cst_53 : f32 to vector<8x32xf32>
    %389 = arith.maximumf %387, %388 : vector<8x32xf32>
    %390 = arith.truncf %389 : vector<8x32xf32> to vector<8x32xbf16>
    %cst_54 = arith.constant dense<0.000000e+00> : vector<8x16xf32>
    %391 = tpu.matmul %390, %348, %cst_54 {dimension_numbers = #tpu.dot_dimension_numbers<[1], [0], [0], [1], [0, 0, 1, 1], [], []>} : vector<8x32xbf16>, vector<32x16xbf16>, vector<8x16xf32> -> vector<8x16xf32>
    %392 = vector.broadcast %355 : vector<1x16xf32> to vector<8x16xf32>
    %393 = arith.addf %391, %392 : vector<8x16xf32>
    %394 = vector.shape_cast %383 : vector<8x1xf32> to vector<8x1xf32>
    %395 = vector.broadcast %394 : vector<8x1xf32> to vector<8x8xf32>
    %cst_55 = arith.constant 0.000000e+00 : f32
    %396 = vector.broadcast %cst_55 : f32 to vector<8x96xf32>
    %397 = tpu.concatenate %373, %393, %395, %396 in 1 : vector<8x8xf32>, vector<8x16xf32>, vector<8x8xf32>, vector<8x96xf32> -> vector<8x128xf32>
    %c0_56 = arith.constant 0 : index
    %c0_57 = arith.constant 0 : index
    %398 = vector.load %arg3[%c0_56, %c0_57] : memref<8x128xf32, #tpu.memory_space<vmem>>, vector<8x128xf32>
    tpu.vector_store %arg3[%c0_56, %c0_57], %397 {strides = array<i32>} : memref<8x128xf32, #tpu.memory_space<vmem>>, vector<8x128xf32>,
    return
  }
}

</mosaic_0001>

<llo_original>
// kernel: s2one_forward.1
$region0: #{s2one_forward.1}
  #allocation0 [shape = 'u32[]', space=smem, size = 0x4, offset = 0x4, fixed_abs, tag = 'smem constant byte address 0x4 - core index']
  #allocation1 [shape = 'u32[144,128]{1,0:T(1,128)}', space=vmem, size = 0x12000, scoped, tag = 'internal scratch']
  %s0 = inlined_call_operand.vmem [shape: f32[64,16], index: 0, kind: input, shape index: {}]
  %s1 = inlined_call_operand.vmem [shape: f32[8,8], index: 1, kind: input, shape index: {}]
  %s2 = inlined_call_operand.hbm [shape: f32[176,128], index: 2, kind: input, shape index: {}]
  %s3 = inlined_call_operand.vmem [shape: f32[8,128], index: 3, kind: output, shape index: {}]
  %s4 = sld [smem:[#allocation0]]
  $region26: #{s2one_forward.1} parent=0
    _
  %s6 = ssub.s32 1, %s4
  %s7 = scalar_select 0, %s6, %s4
  $region1: #{s2one_forward.1} parent=0
    #allocation2 [shape = 'u8[90112]{0}', space=vmem, size = 0x16000, scoped, tag = 'input window, operand 2, single buffered']
    #allocation3 [shape = 's32[1]{0}', space=sflag, size = 0x4, scoped, tag = 'scoped memory for s2one_forward.1']
    %8 = vsyncpa [#allocation3], 0
    // Predicated region
    $region2: #{s2one_forward.1} parent=1 // pred_check
      _
    $region3: #{s2one_forward.1} parent=1 // pred_check_branch
      %10 = sbr.rel (0) target = $region5
    $region4: #{s2one_forward.1} parent=1 // pred_region
      _
    $region5: #{s2one_forward.1} parent=1 // pred_fallthru
      _
    // Predicated region
    $region6: #{s2one_forward.1} parent=1 // pred_check
      _
    $region7: #{s2one_forward.1} parent=1 // pred_check_branch
      %12 = sbr.rel (0) target = $region9
    $region8: #{s2one_forward.1} parent=1 // pred_region
      _
    $region9: #{s2one_forward.1} parent=1 // pred_fallthru
      _
    // Predicated region
    $region10: #{s2one_forward.1} parent=1 // pred_check
      _
    $region11: #{s2one_forward.1} parent=1 // pred_check_branch
      %14 = sbr.rel (0) target = $region13
    $region12: #{s2one_forward.1} parent=1 // pred_region
      %s16 = ssub.s32 2816, 2816
      %17 = vsyncadd [#allocation3], %s16
      %s18 = sshll.u32 [#allocation2], 4
      %s19 = int_to_ptr.vmem [resolvable:$true] %s18
      %24 = dma.hbm_to_vmem [thread:$0]  %s2, 2816, %s19, [#allocation3], 128, 128, 8
    $region13: #{s2one_forward.1} parent=1 // pred_fallthru
      _
    // Predicated region
    $region14: #{s2one_forward.1} parent=1 // pred_check
      _
    $region15: #{s2one_forward.1} parent=1 // pred_check_branch
      %26 = sbr.rel (0) target = $region17
    $region16: #{s2one_forward.1} parent=1 // pred_region
      %27 = dma.done [#allocation3], 2816
    $region17: #{s2one_forward.1} parent=1 // pred_fallthru
      _
    %v29 = vld [vmem:[#allocation2] sm:$0xff]
    %v30 = vld [vmem:[#allocation2 + $0x8] sm:$0xff]
    %v31 = vpack.c.bf16 %v30, %v29
    %v32 = vld [vmem:[#allocation2 + $0x10] sm:$0xff]
    %v33 = vld [vmem:[#allocation2 + $0x18] sm:$0xff]
    %v34 = vld [vmem:[#allocation2 + $0x20] sm:$0xff]
    %v35 = vld [vmem:[#allocation2 + $0x28] sm:$0xff]
    %v36 = vpack.c.bf16 %v33, %v32
    %v37 = vpack.c.bf16 %v35, %v34
    %v38 = vld [vmem:[#allocation2 + $0x30] sm:$0x1]
    %v39 = vld [vmem:[#allocation2 + $0x38] sm:$0xff]
    %v40 = vld [vmem:[#allocation2 + $0x40] sm:$0xff]
    %v41 = vld [vmem:[#allocation2 + $0x48] sm:$0xff]
    %v42 = vld [vmem:[#allocation2 + $0x50] sm:$0xff]
    %v43 = vld [vmem:[#allocation2 + $0x58] sm:$0xff]
    %v44 = vld [vmem:[#allocation2 + $0x60] sm:$0xff]
    %v45 = vld [vmem:[#allocation2 + $0x68] sm:$0xff]
    %v46 = vld [vmem:[#allocation2 + $0x70] sm:$0xff]
    %v47 = vpack.c.bf16 %v40, %v39
    %v48 = vpack.c.bf16 %v42, %v41
    %v49 = vpack.c.bf16 %v44, %v43
    %v50 = vpack.c.bf16 %v46, %v45
    %v51 = vld [vmem:[#allocation2 + $0x78] sm:$0x1]
    %v52 = vld [vmem:[%s0] sm:$0xff]
    %v53 = vld [vmem:[%s0 + $0x8] sm:$0xff]
    %v54 = vld [vmem:[%s0 + $0x10] sm:$0xff]
    %v55 = vld [vmem:[%s0 + $0x18] sm:$0xff]
    %v56 = vld [vmem:[%s0 + $0x20] sm:$0xff]
    %v57 = vld [vmem:[%s0 + $0x28] sm:$0xff]
    %v58 = vld [vmem:[%s0 + $0x30] sm:$0xff]
    %v59 = vld [vmem:[%s0 + $0x38] sm:$0xff]
    %v60 = vpack.c.bf16 %v53, %v52
    %v61 = vpack.c.bf16 %v55, %v54
    %v62 = vpack.c.bf16 %v57, %v56
    %v63 = vpack.c.bf16 %v59, %v58
    %v64 = vlaneseq
    %v65 = vshrl.u32 %v64, 7
    %v66 = vsub.s32 0, %v65
    %v67 = vrot.slane %v38, %v66
    %vm68 = vcmask 130048
    %v70 = vsel %vm68, %v60, 0
    %v73 = vsel %vm68, %v61, 0
    %v76 = vsel %vm68, %v62, 0
    %v79 = vsel %vm68, %v63, 0
    %81 = vmatprep.subr.bf16.mxu0 0
    %82 = vmatpush1.bf16.msra.mxu0 %v31
    %83 = vmatprep.subr.bf16.mxu0 0
    %84 = vmatpush1.bf16.msra.mxu0 0
    %85 = vmatprep.subr.bf16.mxu0 0
    %86 = vmatpush1.bf16.msra.mxu0 0
    %87 = vmatprep.subr.bf16.mxu0 0
    %88 = vmatpush1.bf16.msra.mxu0 0
    %89 = vmatprep.subr.bf16.mxu0 0
    %90 = vmatpush1.bf16.msra.mxu0 0
    %91 = vmatprep.subr.bf16.mxu0 0
    %92 = vmatpush1.bf16.msra.mxu0 0
    %93 = vmatprep.subr.bf16.mxu0 0
    %94 = vmatpush1.bf16.msra.mxu0 0
    %95 = vmatprep.subr.bf16.mxu0 0
    %96 = vmatpush1.bf16.msra.mxu0 0
    %97 = vmatprep.subr.bf16.mxu0 0
    %98 = vmatpush1.bf16.msra.mxu0 0
    %99 = vmatprep.subr.bf16.mxu0 0
    %100 = vmatpush1.bf16.msra.mxu0 0
    %101 = vmatprep.subr.bf16.mxu0 0
    %102 = vmatpush1.bf16.msra.mxu0 0
    %103 = vmatprep.subr.bf16.mxu0 0
    %104 = vmatpush1.bf16.msra.mxu0 0
    %105 = vmatprep.subr.bf16.mxu0 0
    %106 = vmatpush1.bf16.msra.mxu0 0
    %107 = vmatprep.subr.bf16.mxu0 0
    %108 = vmatpush1.bf16.msra.mxu0 0
    %109 = vmatprep.subr.bf16.mxu0 0
    %110 = vmatpush1.bf16.msra.mxu0 0
    %111 = vmatprep.subr.bf16.mxu0 0
    %112 = vmatpush1.bf16.msra.mxu0 0
    %113 = vmatprep.mubr.bf16.mxu0 0
    %114 = vmatmul.mubr.bf16.gmra.mrb[0].mxu0 %v70
    %v115 = vpop.f32.mrb[0].mxu0
    %v116 = vadd.f32 %v67, %v115
    %v117 = vpop.f32.mrb[0].mxu0
    %v118 = vpop.f32.mrb[0].mxu0
    %v119 = vadd.f32 %v67, %v118
    %v120 = vpop.f32.mrb[0].mxu0
    %121 = vmatprep.mubr.bf16.mxu0 0
    %122 = vmatmul.mubr.bf16.gmra.mrb[0].mxu0 %v73
    %v123 = vpop.f32.mrb[0].mxu0
    %v124 = vadd.f32 %v67, %v123
    %v125 = vpop.f32.mrb[0].mxu0
    %v126 = vpop.f32.mrb[0].mxu0
    %v127 = vadd.f32 %v67, %v126
    %v128 = vpop.f32.mrb[0].mxu0
    %129 = vmatprep.mubr.bf16.mxu0 0
    %130 = vmatmul.mubr.bf16.gmra.mrb[0].mxu0 %v76
    %v131 = vpop.f32.mrb[0].mxu0
    %v132 = vadd.f32 %v67, %v131
    %v133 = vpop.f32.mrb[0].mxu0
    %v134 = vpop.f32.mrb[0].mxu0
    %v135 = vadd.f32 %v67, %v134
    %v136 = vpop.f32.mrb[0].mxu0
    %137 = vmatprep.mubr.bf16.mxu0 0
    %138 = vmatmul.mubr.bf16.gmra.mrb[0].mxu0 %v79
    %v139 = vpop.f32.mrb[0].mxu0
    %v140 = vadd.f32 %v67, %v139
    %v141 = vpop.f32.mrb[0].mxu0
    %v142 = vpop.f32.mrb[0].mxu0
    %v143 = vadd.f32 %v67, %v142
    %v144 = vpop.f32.mrb[0].mxu0
    %145 = vdwg.mxu0
    %vm146 = vcmask 261120
    %v148 = vsel %vm146, 0, 0
    %150 = vmatprep.subr.bf16.mxu0 0
    %151 = vmatpush1.bf16.msra.mxu0 %v36
    %152 = vmatprep.subr.bf16.mxu0 0
    %153 = vmatpush1.bf16.msra.mxu0 %v37
    %154 = vmatprep.subr.bf16.mxu0 0
    %155 = vmatpush1.bf16.msra.mxu0 0
    %156 = vmatprep.subr.bf16.mxu0 0
    %157 = vmatpush1.bf16.msra.mxu0 0
    %158 = vmatprep.subr.bf16.mxu0 0
    %159 = vmatpush1.bf16.msra.mxu0 0
    %160 = vmatprep.subr.bf16.mxu0 0
    %161 = vmatpush1.bf16.msra.mxu0 0
    %162 = vmatprep.subr.bf16.mxu0 0
    %163 = vmatpush1.bf16.msra.mxu0 0
    %164 = vmatprep.subr.bf16.mxu0 0
    %165 = vmatpush1.bf16.msra.mxu0 0
    %166 = vmatprep.subr.bf16.mxu0 0
    %167 = vmatpush1.bf16.msra.mxu0 0
    %168 = vmatprep.subr.bf16.mxu0 0
    %169 = vmatpush1.bf16.msra.mxu0 0
    %170 = vmatprep.subr.bf16.mxu0 0
    %171 = vmatpush1.bf16.msra.mxu0 0
    %172 = vmatprep.subr.bf16.mxu0 0
    %173 = vmatpush1.bf16.msra.mxu0 0
    %174 = vmatprep.subr.bf16.mxu0 0
    %175 = vmatpush1.bf16.msra.mxu0 0
    %176 = vmatprep.subr.bf16.mxu0 0
    %177 = vmatpush1.bf16.msra.mxu0 0
    %178 = vmatprep.subr.bf16.mxu0 0
    %179 = vmatpush1.bf16.msra.mxu0 0
    %180 = vmatprep.subr.bf16.mxu0 0
    %181 = vmatpush1.bf16.msra.mxu0 0
    %182 = vmatprep.mubr.bf16.mxu0 0
    %183 = vmatmul.mubr.bf16.gmra.mrb[0].mxu0 %v148
    %v184 = vpop.f32.mrb[0].mxu0
    %v185 = vadd.f32 0.0, %v184
    %v186 = vpop.f32.mrb[0].mxu0
    %v187 = vpop.f32.mrb[0].mxu0
    %v188 = vpop.f32.mrb[0].mxu0
    %189 = vdwg.mxu0
    %v190 = vadd.f32 %v116, %v185
    %v191 = vxor.u32 %v190, 2147483648
    %v192 = vmul.f32 %v191, 1.442695
    %v193 = vpow.pop %v192
    %v194 = vadd.f32 %v193, 1.0
    %v195 = vrcp.pop %v194
    %v196 = vmul.f32 1.0, %v195
    %v197 = vtanh.pop %v190
    %v198 = vmul.f32 %v196, 0.0
    %200 = vrot.lane.b32.xlu0 %v197, 32
    %v201 = vpop.permute.xlu0 %200
    %v203 = vmul.f32 %v196, %v201
    %205 = vrot.lane.b32.xlu0 %v203, 32
    %v206 = vpop.permute.xlu0 %205
    %v208 = vadd.f32 %v198, %v206
    %v209 = vtanh.pop %v208
    %211 = vrot.lane.b32.xlu0 %v209, 32
    %v212 = vpop.permute.xlu0 %211
    %v214 = vmul.f32 %v196, %v212
    %216 = vrot.lane.b32.xlu0 %v214, 64
    %v217 = vpop.permute.xlu0 %216
    %v219 = vsel %vm146, %v217, 0.0
    %v220 = vpack.c.bf16 %v219, %v219
    %v221 = vlaneseq
    %v222 = vshrl.u32 %v221, 7
    %v223 = vsub.s32 0, %v222
    %v224 = vrot.slane %v51, %v223
    %vm225 = vcmask 523264
    %v227 = vsel %vm225, %v220, 0
    %229 = vmatprep.subr.bf16.mxu0 0
    %230 = vmatpush1.bf16.msra.mxu0 %v47
    %231 = vmatprep.subr.bf16.mxu0 0
    %232 = vmatpush1.bf16.msra.mxu0 %v48
    %233 = vmatprep.subr.bf16.mxu0 0
    %234 = vmatpush1.bf16.msra.mxu0 %v49
    %235 = vmatprep.subr.bf16.mxu0 0
    %236 = vmatpush1.bf16.msra.mxu0 %v50
    %237 = vmatprep.subr.bf16.mxu0 0
    %238 = vmatpush1.bf16.msra.mxu0 0
    %239 = vmatprep.subr.bf16.mxu0 0
    %240 = vmatpush1.bf16.msra.mxu0 0
    %241 = vmatprep.subr.bf16.mxu0 0
    %242 = vmatpush1.bf16.msra.mxu0 0
    %243 = vmatprep.subr.bf16.mxu0 0
    %244 = vmatpush1.bf16.msra.mxu0 0
    %245 = vmatprep.subr.bf16.mxu0 0
    %246 = vmatpush1.bf16.msra.mxu0 0
    %247 = vmatprep.subr.bf16.mxu0 0
    %248 = vmatpush1.bf16.msra.mxu0 0
    %249 = vmatprep.subr.bf16.mxu0 0
    %250 = vmatpush1.bf16.msra.mxu0 0
    %251 = vmatprep.subr.bf16.mxu0 0
    %252 = vmatpush1.bf16.msra.mxu0 0
    %253 = vmatprep.subr.bf16.mxu0 0
    %254 = vmatpush1.bf16.msra.mxu0 0
    %255 = vmatprep.subr.bf16.mxu0 0
    %256 = vmatpush1.bf16.msra.mxu0 0
    %257 = vmatprep.subr.bf16.mxu0 0
    %258 = vmatpush1.bf16.msra.mxu0 0
    %259 = vmatprep.subr.bf16.mxu0 0
    %260 = vmatpush1.bf16.msra.mxu0 0
    %261 = vmatprep.mubr.bf16.mxu0 0
    %262 = vmatmul.mubr.bf16.gmra.mrb[0].mxu0 %v227
    %v263 = vpop.f32.mrb[0].mxu0
    %v264 = vadd.f32 %v224, %v263
    %v265 = vpop.f32.mrb[0].mxu0
    %v266 = vpop.f32.mrb[0].mxu0
    %v267 = vpop.f32.mrb[0].mxu0
    %268 = vdwg.mxu0
    %v269 = vxor.u32 %v264, 2147483648
    %v270 = vmul.f32 %v269, 1.442695
    %v271 = vpow.pop %v270
    %v272 = vadd.f32 %v271, 1.0
    %v273 = vrcp.pop %v272
    %v274 = vmul.f32 1.0, %v273
    %v275 = vtanh.pop %v264
    %v276 = vmul.f32 %v274, 0.0
    %278 = vrot.lane.b32.xlu0 %v275, 32
    %v279 = vpop.permute.xlu0 %278
    %v281 = vmul.f32 %v274, %v279
    %283 = vrot.lane.b32.xlu0 %v281, 32
    %v284 = vpop.permute.xlu0 %283
    %v286 = vadd.f32 %v276, %v284
    %v287 = vtanh.pop %v286
    %289 = vrot.lane.b32.xlu0 %v287, 32
    %v290 = vpop.permute.xlu0 %289
    %v292 = vmul.f32 %v274, %v290
    %v293 = vpack.c.bf16 %v214, %v214
    %295 = vrot.lane.b32.xlu0 %v293, 64
    %v296 = vpop.permute.xlu0 %295
    %v298 = vsel %vm146, %v296, 0
    %300 = vmatprep.subr.bf16.mxu0 0
    %301 = vmatpush1.bf16.msra.mxu0 %v36
    %302 = vmatprep.subr.bf16.mxu0 0
    %303 = vmatpush1.bf16.msra.mxu0 %v37
    %304 = vmatprep.subr.bf16.mxu0 0
    %305 = vmatpush1.bf16.msra.mxu0 0
    %306 = vmatprep.subr.bf16.mxu0 0
    %307 = vmatpush1.bf16.msra.mxu0 0
    %308 = vmatprep.subr.bf16.mxu0 0
    %309 = vmatpush1.bf16.msra.mxu0 0
    %310 = vmatprep.subr.bf16.mxu0 0
    %311 = vmatpush1.bf16.msra.mxu0 0
    %312 = vmatprep.subr.bf16.mxu0 0
    %313 = vmatpush1.bf16.msra.mxu0 0
    %314 = vmatprep.subr.bf16.mxu0 0
    %315 = vmatpush1.bf16.msra.mxu0 0
    %316 = vmatprep.subr.bf16.mxu0 0
    %317 = vmatpush1.bf16.msra.mxu0 0
    %318 = vmatprep.subr.bf16.mxu0 0
    %319 = vmatpush1.bf16.msra.mxu0 0
    %320 = vmatprep.subr.bf16.mxu0 0
    %321 = vmatpush1.bf16.msra.mxu0 0
    %322 = vmatprep.subr.bf16.mxu0 0
    %323 = vmatpush1.bf16.msra.mxu0 0
    %324 = vmatprep.subr.bf16.mxu0 0
    %325 = vmatpush1.bf16.msra.mxu0 0
    %326 = vmatprep.subr.bf16.mxu0 0
    %327 = vmatpush1.bf16.msra.mxu0 0
    %328 = vmatprep.subr.bf16.mxu0 0
    %329 = vmatpush1.bf16.msra.mxu0 0
    %330 = vmatprep.subr.bf16.mxu0 0
    %331 = vmatpush1.bf16.msra.mxu0 0
    %332 = vmatprep.mubr.bf16.mxu0 0
    %333 = vmatmul.mubr.bf16.gmra.mrb[0].mxu0 %v298
    %v334 = vpop.f32.mrb[0].mxu0
    %v335 = vadd.f32 0.0, %v334
    %v336 = vpop.f32.mrb[0].mxu0
    %v337 = vpop.f32.mrb[0].mxu0
    %v338 = vpop.f32.mrb[0].mxu0
    %339 = vdwg.mxu0
    %v340 = vadd.f32 %v119, %v335
    %v341 = vxor.u32 %v340, 2147483648
    %v342 = vmul.f32 %v341, 1.442695
    %v343 = vpow.pop %v342
    %v344 = vadd.f32 %v343, 1.0
    %v345 = vrcp.pop %v344
    %v346 = vmul.f32 1.0, %v345
    %v347 = vtanh.pop %v340
    %v348 = vmul.f32 %v346, %v208
    %350 = vrot.lane.b32.xlu0 %v347, 32
    %v351 = vpop.permute.xlu0 %350
    %v353 = vmul.f32 %v346, %v351
    %355 = vrot.lane.b32.xlu0 %v353, 32
    %v356 = vpop.permute.xlu0 %355
    %v358 = vadd.f32 %v348, %v356
    %v359 = vtanh.pop %v358
    %361 = vrot.lane.b32.xlu0 %v359, 32
    %v362 = vpop.permute.xlu0 %361
    %v364 = vmul.f32 %v346, %v362
    %366 = vrot.lane.b32.xlu0 %v364, 64
    %v367 = vpop.permute.xlu0 %366
    %370 = vrot.lane.b32.xlu0 %v292, 96
    %v371 = vpop.permute.xlu0 %370
    %v373 = vsel %vm146, %v367, %v371
    %v374 = vpack.c.bf16 %v373, %v373
    %v376 = vsel %vm225, %v374, 0
    %378 = vmatprep.subr.bf16.mxu0 0
    %379 = vmatpush1.bf16.msra.mxu0 %v47
    %380 = vmatprep.subr.bf16.mxu0 0
    %381 = vmatpush1.bf16.msra.mxu0 %v48
    %382 = vmatprep.subr.bf16.mxu0 0
    %383 = vmatpush1.bf16.msra.mxu0 %v49
    %384 = vmatprep.subr.bf16.mxu0 0
    %385 = vmatpush1.bf16.msra.mxu0 %v50
    %386 = vmatprep.subr.bf16.mxu0 0
    %387 = vmatpush1.bf16.msra.mxu0 0
    %388 = vmatprep.subr.bf16.mxu0 0
    %389 = vmatpush1.bf16.msra.mxu0 0
    %390 = vmatprep.subr.bf16.mxu0 0
    %391 = vmatpush1.bf16.msra.mxu0 0
    %392 = vmatprep.subr.bf16.mxu0 0
    %393 = vmatpush1.bf16.msra.mxu0 0
    %394 = vmatprep.subr.bf16.mxu0 0
    %395 = vmatpush1.bf16.msra.mxu0 0
    %396 = vmatprep.subr.bf16.mxu0 0
    %397 = vmatpush1.bf16.msra.mxu0 0
    %398 = vmatprep.subr.bf16.mxu0 0
    %399 = vmatpush1.bf16.msra.mxu0 0
    %400 = vmatprep.subr.bf16.mxu0 0
    %401 = vmatpush1.bf16.msra.mxu0 0
    %402 = vmatprep.subr.bf16.mxu0 0
    %403 = vmatpush1.bf16.msra.mxu0 0
    %404 = vmatprep.subr.bf16.mxu0 0
    %405 = vmatpush1.bf16.msra.mxu0 0
    %406 = vmatprep.subr.bf16.mxu0 0
    %407 = vmatpush1.bf16.msra.mxu0 0
    %408 = vmatprep.subr.bf16.mxu0 0
    %409 = vmatpush1.bf16.msra.mxu0 0
    %410 = vmatprep.mubr.bf16.mxu0 0
    %411 = vmatmul.mubr.bf16.gmra.mrb[0].mxu0 %v376
    %v412 = vpop.f32.mrb[0].mxu0
    %v413 = vadd.f32 %v224, %v412
    %v414 = vpop.f32.mrb[0].mxu0
    %v415 = vpop.f32.mrb[0].mxu0
    %v416 = vpop.f32.mrb[0].mxu0
    %417 = vdwg.mxu0
    %v418 = vxor.u32 %v413, 2147483648
    %v419 = vmul.f32 %v418, 1.442695
    %v420 = vpow.pop %v419
    %v421 = vadd.f32 %v420, 1.0
    %v422 = vrcp.pop %v421
    %v423 = vmul.f32 1.0, %v422
    %v424 = vtanh.pop %v413
    %v425 = vmul.f32 %v423, %v286
    %427 = vrot.lane.b32.xlu0 %v424, 32
    %v428 = vpop.permute.xlu0 %427
    %v430 = vmul.f32 %v423, %v428
    %432 = vrot.lane.b32.xlu0 %v430, 32
    %v433 = vpop.permute.xlu0 %432
    %v435 = vadd.f32 %v425, %v433
    %v436 = vtanh.pop %v435
    %438 = vrot.lane.b32.xlu0 %v436, 32
    %v439 = vpop.permute.xlu0 %438
    %v441 = vmul.f32 %v423, %v439
    %v442 = vpack.c.bf16 %v364, %v364
    %444 = vrot.lane.b32.xlu0 %v442, 64
    %v445 = vpop.permute.xlu0 %444
    %v447 = vsel %vm146, %v445, 0
    %449 = vmatprep.subr.bf16.mxu0 0
    %450 = vmatpush1.bf16.msra.mxu0 %v36
    %451 = vmatprep.subr.bf16.mxu0 0
    %452 = vmatpush1.bf16.msra.mxu0 %v37
    %453 = vmatprep.subr.bf16.mxu0 0
    %454 = vmatpush1.bf16.msra.mxu0 0
    %455 = vmatprep.subr.bf16.mxu0 0
    %456 = vmatpush1.bf16.msra.mxu0 0
    %457 = vmatprep.subr.bf16.mxu0 0
    %458 = vmatpush1.bf16.msra.mxu0 0
    %459 = vmatprep.subr.bf16.mxu0 0
    %460 = vmatpush1.bf16.msra.mxu0 0
    %461 = vmatprep.subr.bf16.mxu0 0
    %462 = vmatpush1.bf16.msra.mxu0 0
    %463 = vmatprep.subr.bf16.mxu0 0
    %464 = vmatpush1.bf16.msra.mxu0 0
    %465 = vmatprep.subr.bf16.mxu0 0
    %466 = vmatpush1.bf16.msra.mxu0 0
    %467 = vmatprep.subr.bf16.mxu0 0
    %468 = vmatpush1.bf16.msra.mxu0 0
    %469 = vmatprep.subr.bf16.mxu0 0
    %470 = vmatpush1.bf16.msra.mxu0 0
    %471 = vmatprep.subr.bf16.mxu0 0
    %472 = vmatpush1.bf16.msra.mxu0 0
    %473 = vmatprep.subr.bf16.mxu0 0
    %474 = vmatpush1.bf16.msra.mxu0 0
    %475 = vmatprep.subr.bf16.mxu0 0
    %476 = vmatpush1.bf16.msra.mxu0 0
    %477 = vmatprep.subr.bf16.mxu0 0
    %478 = vmatpush1.bf16.msra.mxu0 0
    %479 = vmatprep.subr.bf16.mxu0 0
    %480 = vmatpush1.bf16.msra.mxu0 0
    %481 = vmatprep.mubr.bf16.mxu0 0
    %482 = vmatmul.mubr.bf16.gmra.mrb[0].mxu0 %v447
    %v483 = vpop.f32.mrb[0].mxu0
    %v484 = vadd.f32 0.0, %v483
    %v485 = vpop.f32.mrb[0].mxu0
    %v486 = vpop.f32.mrb[0].mxu0
    %v487 = vpop.f32.mrb[0].mxu0
    %488 = vdwg.mxu0
    %v489 = vadd.f32 %v124, %v484
    %v490 = vxor.u32 %v489, 2147483648
    %v491 = vmul.f32 %v490, 1.442695
    %v492 = vpow.pop %v491
    %v493 = vadd.f32 %v492, 1.0
    %v494 = vrcp.pop %v493
    %v495 = vmul.f32 1.0, %v494
    %v496 = vtanh.pop %v489
    %v497 = vmul.f32 %v495, %v358
    %499 = vrot.lane.b32.xlu0 %v496, 32
    %v500 = vpop.permute.xlu0 %499
    %v502 = vmul.f32 %v495, %v500
    %504 = vrot.lane.b32.xlu0 %v502, 32
    %v505 = vpop.permute.xlu0 %504
    %v507 = vadd.f32 %v497, %v505
    %v508 = vtanh.pop %v507
    %510 = vrot.lane.b32.xlu0 %v508, 32
    %v511 = vpop.permute.xlu0 %510
    %v513 = vmul.f32 %v495, %v511
    %515 = vrot.lane.b32.xlu0 %v513, 64
    %v516 = vpop.permute.xlu0 %515
    %519 = vrot.lane.b32.xlu0 %v441, 96
    %v520 = vpop.permute.xlu0 %519
    %v522 = vsel %vm146, %v516, %v520
    %v523 = vpack.c.bf16 %v522, %v522
    %v525 = vsel %vm225, %v523, 0
    %527 = vmatprep.subr.bf16.mxu0 0
    %528 = vmatpush1.bf16.msra.mxu0 %v47
    %529 = vmatprep.subr.bf16.mxu0 0
    %530 = vmatpush1.bf16.msra.mxu0 %v48
    %531 = vmatprep.subr.bf16.mxu0 0
    %532 = vmatpush1.bf16.msra.mxu0 %v49
    %533 = vmatprep.subr.bf16.mxu0 0
    %534 = vmatpush1.bf16.msra.mxu0 %v50
    %535 = vmatprep.subr.bf16.mxu0 0
    %536 = vmatpush1.bf16.msra.mxu0 0
    %537 = vmatprep.subr.bf16.mxu0 0
    %538 = vmatpush1.bf16.msra.mxu0 0
    %539 = vmatprep.subr.bf16.mxu0 0
    %540 = vmatpush1.bf16.msra.mxu0 0
    %541 = vmatprep.subr.bf16.mxu0 0
    %542 = vmatpush1.bf16.msra.mxu0 0
    %543 = vmatprep.subr.bf16.mxu0 0
    %544 = vmatpush1.bf16.msra.mxu0 0
    %545 = vmatprep.subr.bf16.mxu0 0
    %546 = vmatpush1.bf16.msra.mxu0 0
    %547 = vmatprep.subr.bf16.mxu0 0
    %548 = vmatpush1.bf16.msra.mxu0 0
    %549 = vmatprep.subr.bf16.mxu0 0
    %550 = vmatpush1.bf16.msra.mxu0 0
    %551 = vmatprep.subr.bf16.mxu0 0
    %552 = vmatpush1.bf16.msra.mxu0 0
    %553 = vmatprep.subr.bf16.mxu0 0
    %554 = vmatpush1.bf16.msra.mxu0 0
    %555 = vmatprep.subr.bf16.mxu0 0
    %556 = vmatpush1.bf16.msra.mxu0 0
    %557 = vmatprep.subr.bf16.mxu0 0
    %558 = vmatpush1.bf16.msra.mxu0 0
    %559 = vmatprep.mubr.bf16.mxu0 0
    %560 = vmatmul.mubr.bf16.gmra.mrb[0].mxu0 %v525
    %v561 = vpop.f32.mrb[0].mxu0
    %v562 = vadd.f32 %v224, %v561
    %v563 = vpop.f32.mrb[0].mxu0
    %v564 = vpop.f32.mrb[0].mxu0
    %v565 = vpop.f32.mrb[0].mxu0
    %566 = vdwg.mxu0
    %v567 = vxor.u32 %v562, 2147483648
    %v568 = vmul.f32 %v567, 1.442695
    %v569 = vpow.pop %v568
    %v570 = vadd.f32 %v569, 1.0
    %v571 = vrcp.pop %v570
    %v572 = vmul.f32 1.0, %v571
    %v573 = vtanh.pop %v562
    %v574 = vmul.f32 %v572, %v435
    %576 = vrot.lane.b32.xlu0 %v573, 32
    %v577 = vpop.permute.xlu0 %576
    %v579 = vmul.f32 %v572, %v577
    %581 = vrot.lane.b32.xlu0 %v579, 32
    %v582 = vpop.permute.xlu0 %581
    %v584 = vadd.f32 %v574, %v582
    %v585 = vtanh.pop %v584
    %587 = vrot.lane.b32.xlu0 %v585, 32
    %v588 = vpop.permute.xlu0 %587
    %v590 = vmul.f32 %v572, %v588
    %v591 = vpack.c.bf16 %v513, %v513
    %593 = vrot.lane.b32.xlu0 %v591, 64
    %v594 = vpop.permute.xlu0 %593
    %v596 = vsel %vm146, %v594, 0
    %598 = vmatprep.subr.bf16.mxu0 0
    %599 = vmatpush1.bf16.msra.mxu0 %v36
    %600 = vmatprep.subr.bf16.mxu0 0
    %601 = vmatpush1.bf16.msra.mxu0 %v37
    %602 = vmatprep.subr.bf16.mxu0 0
    %603 = vmatpush1.bf16.msra.mxu0 0
    %604 = vmatprep.subr.bf16.mxu0 0
    %605 = vmatpush1.bf16.msra.mxu0 0
    %606 = vmatprep.subr.bf16.mxu0 0
    %607 = vmatpush1.bf16.msra.mxu0 0
    %608 = vmatprep.subr.bf16.mxu0 0
    %609 = vmatpush1.bf16.msra.mxu0 0
    %610 = vmatprep.subr.bf16.mxu0 0
    %611 = vmatpush1.bf16.msra.mxu0 0
    %612 = vmatprep.subr.bf16.mxu0 0
    %613 = vmatpush1.bf16.msra.mxu0 0
    %614 = vmatprep.subr.bf16.mxu0 0
    %615 = vmatpush1.bf16.msra.mxu0 0
    %616 = vmatprep.subr.bf16.mxu0 0
    %617 = vmatpush1.bf16.msra.mxu0 0
    %618 = vmatprep.subr.bf16.mxu0 0
    %619 = vmatpush1.bf16.msra.mxu0 0
    %620 = vmatprep.subr.bf16.mxu0 0
    %621 = vmatpush1.bf16.msra.mxu0 0
    %622 = vmatprep.subr.bf16.mxu0 0
    %623 = vmatpush1.bf16.msra.mxu0 0
    %624 = vmatprep.subr.bf16.mxu0 0
    %625 = vmatpush1.bf16.msra.mxu0 0
    %626 = vmatprep.subr.bf16.mxu0 0
    %627 = vmatpush1.bf16.msra.mxu0 0
    %628 = vmatprep.subr.bf16.mxu0 0
    %629 = vmatpush1.bf16.msra.mxu0 0
    %630 = vmatprep.mubr.bf16.mxu0 0
    %631 = vmatmul.mubr.bf16.gmra.mrb[0].mxu0 %v596
    %v632 = vpop.f32.mrb[0].mxu0
    %v633 = vadd.f32 0.0, %v632
    %v634 = vpop.f32.mrb[0].mxu0
    %v635 = vpop.f32.mrb[0].mxu0
    %v636 = vpop.f32.mrb[0].mxu0
    %637 = vdwg.mxu0
    %v638 = vadd.f32 %v127, %v633
    %v639 = vxor.u32 %v638, 2147483648
    %v640 = vmul.f32 %v639, 1.442695
    %v641 = vpow.pop %v640
    %v642 = vadd.f32 %v641, 1.0
    %v643 = vrcp.pop %v642
    %v644 = vmul.f32 1.0, %v643
    %v645 = vtanh.pop %v638
    %v646 = vmul.f32 %v644, %v507
    %648 = vrot.lane.b32.xlu0 %v645, 32
    %v649 = vpop.permute.xlu0 %648
    %v651 = vmul.f32 %v644, %v649
    %653 = vrot.lane.b32.xlu0 %v651, 32
    %v654 = vpop.permute.xlu0 %653
    %v656 = vadd.f32 %v646, %v654
    %v657 = vtanh.pop %v656
    %659 = vrot.lane.b32.xlu0 %v657, 32
    %v660 = vpop.permute.xlu0 %659
    %v662 = vmul.f32 %v644, %v660
    %664 = vrot.lane.b32.xlu0 %v662, 64
    %v665 = vpop.permute.xlu0 %664
    %668 = vrot.lane.b32.xlu0 %v590, 96
    %v669 = vpop.permute.xlu0 %668
    %v671 = vsel %vm146, %v665, %v669
    %v672 = vpack.c.bf16 %v671, %v671
    %v674 = vsel %vm225, %v672, 0
    %676 = vmatprep.subr.bf16.mxu0 0
    %677 = vmatpush1.bf16.msra.mxu0 %v47
    %678 = vmatprep.subr.bf16.mxu0 0
    %679 = vmatpush1.bf16.msra.mxu0 %v48
    %680 = vmatprep.subr.bf16.mxu0 0
    %681 = vmatpush1.bf16.msra.mxu0 %v49
    %682 = vmatprep.subr.bf16.mxu0 0
    %683 = vmatpush1.bf16.msra.mxu0 %v50
    %684 = vmatprep.subr.bf16.mxu0 0
    %685 = vmatpush1.bf16.msra.mxu0 0
    %686 = vmatprep.subr.bf16.mxu0 0
    %687 = vmatpush1.bf16.msra.mxu0 0
    %688 = vmatprep.subr.bf16.mxu0 0
    %689 = vmatpush1.bf16.msra.mxu0 0
    %690 = vmatprep.subr.bf16.mxu0 0
    %691 = vmatpush1.bf16.msra.mxu0 0
    %692 = vmatprep.subr.bf16.mxu0 0
    %693 = vmatpush1.bf16.msra.mxu0 0
    %694 = vmatprep.subr.bf16.mxu0 0
    %695 = vmatpush1.bf16.msra.mxu0 0
    %696 = vmatprep.subr.bf16.mxu0 0
    %697 = vmatpush1.bf16.msra.mxu0 0
    %698 = vmatprep.subr.bf16.mxu0 0
    %699 = vmatpush1.bf16.msra.mxu0 0
    %700 = vmatprep.subr.bf16.mxu0 0
    %701 = vmatpush1.bf16.msra.mxu0 0
    %702 = vmatprep.subr.bf16.mxu0 0
    %703 = vmatpush1.bf16.msra.mxu0 0
    %704 = vmatprep.subr.bf16.mxu0 0
    %705 = vmatpush1.bf16.msra.mxu0 0
    %706 = vmatprep.subr.bf16.mxu0 0
    %707 = vmatpush1.bf16.msra.mxu0 0
    %708 = vmatprep.mubr.bf16.mxu0 0
    %709 = vmatmul.mubr.bf16.gmra.mrb[0].mxu0 %v674
    %v710 = vpop.f32.mrb[0].mxu0
    %v711 = vadd.f32 %v224, %v710
    %v712 = vpop.f32.mrb[0].mxu0
    %v713 = vpop.f32.mrb[0].mxu0
    %v714 = vpop.f32.mrb[0].mxu0
    %715 = vdwg.mxu0
    %v716 = vxor.u32 %v711, 2147483648
    %v717 = vmul.f32 %v716, 1.442695
    %v718 = vpow.pop %v717
    %v719 = vadd.f32 %v718, 1.0
    %v720 = vrcp.pop %v719
    %v721 = vmul.f32 1.0, %v720
    %v722 = vtanh.pop %v711
    %v723 = vmul.f32 %v721, %v584
    %725 = vrot.lane.b32.xlu0 %v722, 32
    %v726 = vpop.permute.xlu0 %725
    %v728 = vmul.f32 %v721, %v726
    %730 = vrot.lane.b32.xlu0 %v728, 32
    %v731 = vpop.permute.xlu0 %730
    %v733 = vadd.f32 %v723, %v731
    %v734 = vtanh.pop %v733
    %736 = vrot.lane.b32.xlu0 %v734, 32
    %v737 = vpop.permute.xlu0 %736
    %v739 = vmul.f32 %v721, %v737
    %v740 = vpack.c.bf16 %v662, %v662
    %742 = vrot.lane.b32.xlu0 %v740, 64
    %v743 = vpop.permute.xlu0 %742
    %v745 = vsel %vm146, %v743, 0
    %747 = vmatprep.subr.bf16.mxu0 0
    %748 = vmatpush1.bf16.msra.mxu0 %v36
    %749 = vmatprep.subr.bf16.mxu0 0
    %750 = vmatpush1.bf16.msra.mxu0 %v37
    %751 = vmatprep.subr.bf16.mxu0 0
    %752 = vmatpush1.bf16.msra.mxu0 0
    %753 = vmatprep.subr.bf16.mxu0 0
    %754 = vmatpush1.bf16.msra.mxu0 0
    %755 = vmatprep.subr.bf16.mxu0 0
    %756 = vmatpush1.bf16.msra.mxu0 0
    %757 = vmatprep.subr.bf16.mxu0 0
    %758 = vmatpush1.bf16.msra.mxu0 0
    %759 = vmatprep.subr.bf16.mxu0 0
    %760 = vmatpush1.bf16.msra.mxu0 0
    %761 = vmatprep.subr.bf16.mxu0 0
    %762 = vmatpush1.bf16.msra.mxu0 0
    %763 = vmatprep.subr.bf16.mxu0 0
    %764 = vmatpush1.bf16.msra.mxu0 0
    %765 = vmatprep.subr.bf16.mxu0 0
    %766 = vmatpush1.bf16.msra.mxu0 0
    %767 = vmatprep.subr.bf16.mxu0 0
    %768 = vmatpush1.bf16.msra.mxu0 0
    %769 = vmatprep.subr.bf16.mxu0 0
    %770 = vmatpush1.bf16.msra.mxu0 0
    %771 = vmatprep.subr.bf16.mxu0 0
    %772 = vmatpush1.bf16.msra.mxu0 0
    %773 = vmatprep.subr.bf16.mxu0 0
    %774 = vmatpush1.bf16.msra.mxu0 0
    %775 = vmatprep.subr.bf16.mxu0 0
    %776 = vmatpush1.bf16.msra.mxu0 0
    %777 = vmatprep.subr.bf16.mxu0 0
    %778 = vmatpush1.bf16.msra.mxu0 0
    %779 = vmatprep.mubr.bf16.mxu0 0
    %780 = vmatmul.mubr.bf16.gmra.mrb[0].mxu0 %v745
    %v781 = vpop.f32.mrb[0].mxu0
    %v782 = vadd.f32 0.0, %v781
    %v783 = vpop.f32.mrb[0].mxu0
    %v784 = vpop.f32.mrb[0].mxu0
    %v785 = vpop.f32.mrb[0].mxu0
    %786 = vdwg.mxu0
    %v787 = vadd.f32 %v132, %v782
    %v788 = vxor.u32 %v787, 2147483648
    %v789 = vmul.f32 %v788, 1.442695
    %v790 = vpow.pop %v789
    %v791 = vadd.f32 %v790, 1.0
    %v792 = vrcp.pop %v791
    %v793 = vmul.f32 1.0, %v792
    %v794 = vtanh.pop %v787
    %v795 = vmul.f32 %v793, %v656
    %797 = vrot.lane.b32.xlu0 %v794, 32
    %v798 = vpop.permute.xlu0 %797
    %v800 = vmul.f32 %v793, %v798
    %802 = vrot.lane.b32.xlu0 %v800, 32
    %v803 = vpop.permute.xlu0 %802
    %v805 = vadd.f32 %v795, %v803
    %v806 = vtanh.pop %v805
    %808 = vrot.lane.b32.xlu0 %v806, 32
    %v809 = vpop.permute.xlu0 %808
    %v811 = vmul.f32 %v793, %v809
    %813 = vrot.lane.b32.xlu0 %v811, 64
    %v814 = vpop.permute.xlu0 %813
    %817 = vrot.lane.b32.xlu0 %v739, 96
    %v818 = vpop.permute.xlu0 %817
    %v820 = vsel %vm146, %v814, %v818
    %v821 = vpack.c.bf16 %v820, %v820
    %v823 = vsel %vm225, %v821, 0
    %825 = vmatprep.subr.bf16.mxu0 0
    %826 = vmatpush1.bf16.msra.mxu0 %v47
    %827 = vmatprep.subr.bf16.mxu0 0
    %828 = vmatpush1.bf16.msra.mxu0 %v48
    %829 = vmatprep.subr.bf16.mxu0 0
    %830 = vmatpush1.bf16.msra.mxu0 %v49
    %831 = vmatprep.subr.bf16.mxu0 0
    %832 = vmatpush1.bf16.msra.mxu0 %v50
    %833 = vmatprep.subr.bf16.mxu0 0
    %834 = vmatpush1.bf16.msra.mxu0 0
    %835 = vmatprep.subr.bf16.mxu0 0
    %836 = vmatpush1.bf16.msra.mxu0 0
    %837 = vmatprep.subr.bf16.mxu0 0
    %838 = vmatpush1.bf16.msra.mxu0 0
    %839 = vmatprep.subr.bf16.mxu0 0
    %840 = vmatpush1.bf16.msra.mxu0 0
    %841 = vmatprep.subr.bf16.mxu0 0
    %842 = vmatpush1.bf16.msra.mxu0 0
    %843 = vmatprep.subr.bf16.mxu0 0
    %844 = vmatpush1.bf16.msra.mxu0 0
    %845 = vmatprep.subr.bf16.mxu0 0
    %846 = vmatpush1.bf16.msra.mxu0 0
    %847 = vmatprep.subr.bf16.mxu0 0
    %848 = vmatpush1.bf16.msra.mxu0 0
    %849 = vmatprep.subr.bf16.mxu0 0
    %850 = vmatpush1.bf16.msra.mxu0 0
    %851 = vmatprep.subr.bf16.mxu0 0
    %852 = vmatpush1.bf16.msra.mxu0 0
    %853 = vmatprep.subr.bf16.mxu0 0
    %854 = vmatpush1.bf16.msra.mxu0 0
    %855 = vmatprep.subr.bf16.mxu0 0
    %856 = vmatpush1.bf16.msra.mxu0 0
    %857 = vmatprep.mubr.bf16.mxu0 0
    %858 = vmatmul.mubr.bf16.gmra.mrb[0].mxu0 %v823
    %v859 = vpop.f32.mrb[0].mxu0
    %v860 = vadd.f32 %v224, %v859
    %v861 = vpop.f32.mrb[0].mxu0
    %v862 = vpop.f32.mrb[0].mxu0
    %v863 = vpop.f32.mrb[0].mxu0
    %864 = vdwg.mxu0
    %v865 = vxor.u32 %v860, 2147483648
    %v866 = vmul.f32 %v865, 1.442695
    %v867 = vpow.pop %v866
    %v868 = vadd.f32 %v867, 1.0
    %v869 = vrcp.pop %v868
    %v870 = vmul.f32 1.0, %v869
    %v871 = vtanh.pop %v860
    %v872 = vmul.f32 %v870, %v733
    %874 = vrot.lane.b32.xlu0 %v871, 32
    %v875 = vpop.permute.xlu0 %874
    %v877 = vmul.f32 %v870, %v875
    %879 = vrot.lane.b32.xlu0 %v877, 32
    %v880 = vpop.permute.xlu0 %879
    %v882 = vadd.f32 %v872, %v880
    %v883 = vtanh.pop %v882
    %885 = vrot.lane.b32.xlu0 %v883, 32
    %v886 = vpop.permute.xlu0 %885
    %v888 = vmul.f32 %v870, %v886
    %v889 = vpack.c.bf16 %v811, %v811
    %891 = vrot.lane.b32.xlu0 %v889, 64
    %v892 = vpop.permute.xlu0 %891
    %v894 = vsel %vm146, %v892, 0
    %896 = vmatprep.subr.bf16.mxu0 0
    %897 = vmatpush1.bf16.msra.mxu0 %v36
    %898 = vmatprep.subr.bf16.mxu0 0
    %899 = vmatpush1.bf16.msra.mxu0 %v37
    %900 = vmatprep.subr.bf16.mxu0 0
    %901 = vmatpush1.bf16.msra.mxu0 0
    %902 = vmatprep.subr.bf16.mxu0 0
    %903 = vmatpush1.bf16.msra.mxu0 0
    %904 = vmatprep.subr.bf16.mxu0 0
    %905 = vmatpush1.bf16.msra.mxu0 0
    %906 = vmatprep.subr.bf16.mxu0 0
    %907 = vmatpush1.bf16.msra.mxu0 0
    %908 = vmatprep.subr.bf16.mxu0 0
    %909 = vmatpush1.bf16.msra.mxu0 0
    %910 = vmatprep.subr.bf16.mxu0 0
    %911 = vmatpush1.bf16.msra.mxu0 0
    %912 = vmatprep.subr.bf16.mxu0 0
    %913 = vmatpush1.bf16.msra.mxu0 0
    %914 = vmatprep.subr.bf16.mxu0 0
    %915 = vmatpush1.bf16.msra.mxu0 0
    %916 = vmatprep.subr.bf16.mxu0 0
    %917 = vmatpush1.bf16.msra.mxu0 0
    %918 = vmatprep.subr.bf16.mxu0 0
    %919 = vmatpush1.bf16.msra.mxu0 0
    %920 = vmatprep.subr.bf16.mxu0 0
    %921 = vmatpush1.bf16.msra.mxu0 0
    %922 = vmatprep.subr.bf16.mxu0 0
    %923 = vmatpush1.bf16.msra.mxu0 0
    %924 = vmatprep.subr.bf16.mxu0 0
    %925 = vmatpush1.bf16.msra.mxu0 0
    %926 = vmatprep.subr.bf16.mxu0 0
    %927 = vmatpush1.bf16.msra.mxu0 0
    %928 = vmatprep.mubr.bf16.mxu0 0
    %929 = vmatmul.mubr.bf16.gmra.mrb[0].mxu0 %v894
    %v930 = vpop.f32.mrb[0].mxu0
    %v931 = vadd.f32 0.0, %v930
    %v932 = vpop.f32.mrb[0].mxu0
    %v933 = vpop.f32.mrb[0].mxu0
    %v934 = vpop.f32.mrb[0].mxu0
    %935 = vdwg.mxu0
    %v936 = vadd.f32 %v135, %v931
    %v937 = vxor.u32 %v936, 2147483648
    %v938 = vmul.f32 %v937, 1.442695
    %v939 = vpow.pop %v938
    %v940 = vadd.f32 %v939, 1.0
    %v941 = vrcp.pop %v940
    %v942 = vmul.f32 1.0, %v941
    %v943 = vtanh.pop %v936
    %v944 = vmul.f32 %v942, %v805
    %946 = vrot.lane.b32.xlu0 %v943, 32
    %v947 = vpop.permute.xlu0 %946
    %v949 = vmul.f32 %v942, %v947
    %951 = vrot.lane.b32.xlu0 %v949, 32
    %v952 = vpop.permute.xlu0 %951
    %v954 = vadd.f32 %v944, %v952
    %v955 = vtanh.pop %v954
    %957 = vrot.lane.b32.xlu0 %v955, 32
    %v958 = vpop.permute.xlu0 %957
    %v960 = vmul.f32 %v942, %v958
    %962 = vrot.lane.b32.xlu0 %v960, 64
    %v963 = vpop.permute.xlu0 %962
    %966 = vrot.lane.b32.xlu0 %v888, 96
    %v967 = vpop.permute.xlu0 %966
    %v969 = vsel %vm146, %v963, %v967
    %v970 = vpack.c.bf16 %v969, %v969
    %v972 = vsel %vm225, %v970, 0
    %974 = vmatprep.subr.bf16.mxu0 0
    %975 = vmatpush1.bf16.msra.mxu0 %v47
    %976 = vmatprep.subr.bf16.mxu0 0
    %977 = vmatpush1.bf16.msra.mxu0 %v48
    %978 = vmatprep.subr.bf16.mxu0 0
    %979 = vmatpush1.bf16.msra.mxu0 %v49
    %980 = vmatprep.subr.bf16.mxu0 0
    %981 = vmatpush1.bf16.msra.mxu0 %v50
    %982 = vmatprep.subr.bf16.mxu0 0
    %983 = vmatpush1.bf16.msra.mxu0 0
    %984 = vmatprep.subr.bf16.mxu0 0
    %985 = vmatpush1.bf16.msra.mxu0 0
    %986 = vmatprep.subr.bf16.mxu0 0
    %987 = vmatpush1.bf16.msra.mxu0 0
    %988 = vmatprep.subr.bf16.mxu0 0
    %989 = vmatpush1.bf16.msra.mxu0 0
    %990 = vmatprep.subr.bf16.mxu0 0
    %991 = vmatpush1.bf16.msra.mxu0 0
    %992 = vmatprep.subr.bf16.mxu0 0
    %993 = vmatpush1.bf16.msra.mxu0 0
    %994 = vmatprep.subr.bf16.mxu0 0
    %995 = vmatpush1.bf16.msra.mxu0 0
    %996 = vmatprep.subr.bf16.mxu0 0
    %997 = vmatpush1.bf16.msra.mxu0 0
    %998 = vmatprep.subr.bf16.mxu0 0
    %999 = vmatpush1.bf16.msra.mxu0 0
    %1000 = vmatprep.subr.bf16.mxu0 0
    %1001 = vmatpush1.bf16.msra.mxu0 0
    %1002 = vmatprep.subr.bf16.mxu0 0
    %1003 = vmatpush1.bf16.msra.mxu0 0
    %1004 = vmatprep.subr.bf16.mxu0 0
    %1005 = vmatpush1.bf16.msra.mxu0 0
    %1006 = vmatprep.mubr.bf16.mxu0 0
    %1007 = vmatmul.mubr.bf16.gmra.mrb[0].mxu0 %v972
    %v1008 = vpop.f32.mrb[0].mxu0
    %v1009 = vadd.f32 %v224, %v1008
    %v1010 = vpop.f32.mrb[0].mxu0
    %v1011 = vpop.f32.mrb[0].mxu0
    %v1012 = vpop.f32.mrb[0].mxu0
    %1013 = vdwg.mxu0
    %v1014 = vxor.u32 %v1009, 2147483648
    %v1015 = vmul.f32 %v1014, 1.442695
    %v1016 = vpow.pop %v1015
    %v1017 = vadd.f32 %v1016, 1.0
    %v1018 = vrcp.pop %v1017
    %v1019 = vmul.f32 1.0, %v1018
    %v1020 = vtanh.pop %v1009
    %v1021 = vmul.f32 %v1019, %v882
    %1023 = vrot.lane.b32.xlu0 %v1020, 32
    %v1024 = vpop.permute.xlu0 %1023
    %v1026 = vmul.f32 %v1019, %v1024
    %1028 = vrot.lane.b32.xlu0 %v1026, 32
    %v1029 = vpop.permute.xlu0 %1028
    %v1031 = vadd.f32 %v1021, %v1029
    %v1032 = vtanh.pop %v1031
    %1034 = vrot.lane.b32.xlu0 %v1032, 32
    %v1035 = vpop.permute.xlu0 %1034
    %v1037 = vmul.f32 %v1019, %v1035
    %v1038 = vpack.c.bf16 %v960, %v960
    %1040 = vrot.lane.b32.xlu0 %v1038, 64
    %v1041 = vpop.permute.xlu0 %1040
    %v1043 = vsel %vm146, %v1041, 0
    %1045 = vmatprep.subr.bf16.mxu0 0
    %1046 = vmatpush1.bf16.msra.mxu0 %v36
    %1047 = vmatprep.subr.bf16.mxu0 0
    %1048 = vmatpush1.bf16.msra.mxu0 %v37
    %1049 = vmatprep.subr.bf16.mxu0 0
    %1050 = vmatpush1.bf16.msra.mxu0 0
    %1051 = vmatprep.subr.bf16.mxu0 0
    %1052 = vmatpush1.bf16.msra.mxu0 0
    %1053 = vmatprep.subr.bf16.mxu0 0
    %1054 = vmatpush1.bf16.msra.mxu0 0
    %1055 = vmatprep.subr.bf16.mxu0 0
    %1056 = vmatpush1.bf16.msra.mxu0 0
    %1057 = vmatprep.subr.bf16.mxu0 0
    %1058 = vmatpush1.bf16.msra.mxu0 0
    %1059 = vmatprep.subr.bf16.mxu0 0
    %1060 = vmatpush1.bf16.msra.mxu0 0
    %1061 = vmatprep.subr.bf16.mxu0 0
    %1062 = vmatpush1.bf16.msra.mxu0 0
    %1063 = vmatprep.subr.bf16.mxu0 0
    %1064 = vmatpush1.bf16.msra.mxu0 0
    %1065 = vmatprep.subr.bf16.mxu0 0
    %1066 = vmatpush1.bf16.msra.mxu0 0
    %1067 = vmatprep.subr.bf16.mxu0 0
    %1068 = vmatpush1.bf16.msra.mxu0 0
    %1069 = vmatprep.subr.bf16.mxu0 0
    %1070 = vmatpush1.bf16.msra.mxu0 0
    %1071 = vmatprep.subr.bf16.mxu0 0
    %1072 = vmatpush1.bf16.msra.mxu0 0
    %1073 = vmatprep.subr.bf16.mxu0 0
    %1074 = vmatpush1.bf16.msra.mxu0 0
    %1075 = vmatprep.subr.bf16.mxu0 0
    %1076 = vmatpush1.bf16.msra.mxu0 0
    %1077 = vmatprep.mubr.bf16.mxu0 0
    %1078 = vmatmul.mubr.bf16.gmra.mrb[0].mxu0 %v1043
    %v1079 = vpop.f32.mrb[0].mxu0
    %v1080 = vadd.f32 0.0, %v1079
    %v1081 = vpop.f32.mrb[0].mxu0
    %v1082 = vpop.f32.mrb[0].mxu0
    %v1083 = vpop.f32.mrb[0].mxu0
    %1084 = vdwg.mxu0
    %v1085 = vadd.f32 %v140, %v1080
    %v1086 = vxor.u32 %v1085, 2147483648
    %v1087 = vmul.f32 %v1086, 1.442695
    %v1088 = vpow.pop %v1087
    %v1089 = vadd.f32 %v1088, 1.0
    %v1090 = vrcp.pop %v1089
    %v1091 = vmul.f32 1.0, %v1090
    %v1092 = vtanh.pop %v1085
    %v1093 = vmul.f32 %v1091, %v954
    %1095 = vrot.lane.b32.xlu0 %v1092, 32
    %v1096 = vpop.permute.xlu0 %1095
    %v1098 = vmul.f32 %v1091, %v1096
    %1100 = vrot.lane.b32.xlu0 %v1098, 32
    %v1101 = vpop.permute.xlu0 %1100
    %v1103 = vadd.f32 %v1093, %v1101
    %v1104 = vtanh.pop %v1103
    %1106 = vrot.lane.b32.xlu0 %v1104, 32
    %v1107 = vpop.permute.xlu0 %1106
    %v1109 = vmul.f32 %v1091, %v1107
    %1111 = vrot.lane.b32.xlu0 %v1109, 64
    %v1112 = vpop.permute.xlu0 %1111
    %1115 = vrot.lane.b32.xlu0 %v1037, 96
    %v1116 = vpop.permute.xlu0 %1115
    %v1118 = vsel %vm146, %v1112, %v1116
    %v1119 = vpack.c.bf16 %v1118, %v1118
    %v1121 = vsel %vm225, %v1119, 0
    %1123 = vmatprep.subr.bf16.mxu0 0
    %1124 = vmatpush1.bf16.msra.mxu0 %v47
    %1125 = vmatprep.subr.bf16.mxu0 0
    %1126 = vmatpush1.bf16.msra.mxu0 %v48
    %1127 = vmatprep.subr.bf16.mxu0 0
    %1128 = vmatpush1.bf16.msra.mxu0 %v49
    %1129 = vmatprep.subr.bf16.mxu0 0
    %1130 = vmatpush1.bf16.msra.mxu0 %v50
    %1131 = vmatprep.subr.bf16.mxu0 0
    %1132 = vmatpush1.bf16.msra.mxu0 0
    %1133 = vmatprep.subr.bf16.mxu0 0
    %1134 = vmatpush1.bf16.msra.mxu0 0
    %1135 = vmatprep.subr.bf16.mxu0 0
    %1136 = vmatpush1.bf16.msra.mxu0 0
    %1137 = vmatprep.subr.bf16.mxu0 0
    %1138 = vmatpush1.bf16.msra.mxu0 0
    %1139 = vmatprep.subr.bf16.mxu0 0
    %1140 = vmatpush1.bf16.msra.mxu0 0
    %1141 = vmatprep.subr.bf16.mxu0 0
    %1142 = vmatpush1.bf16.msra.mxu0 0
    %1143 = vmatprep.subr.bf16.mxu0 0
    %1144 = vmatpush1.bf16.msra.mxu0 0
    %1145 = vmatprep.subr.bf16.mxu0 0
    %1146 = vmatpush1.bf16.msra.mxu0 0
    %1147 = vmatprep.subr.bf16.mxu0 0
    %1148 = vmatpush1.bf16.msra.mxu0 0
    %1149 = vmatprep.subr.bf16.mxu0 0
    %1150 = vmatpush1.bf16.msra.mxu0 0
    %1151 = vmatprep.subr.bf16.mxu0 0
    %1152 = vmatpush1.bf16.msra.mxu0 0
    %1153 = vmatprep.subr.bf16.mxu0 0
    %1154 = vmatpush1.bf16.msra.mxu0 0
    %1155 = vmatprep.mubr.bf16.mxu0 0
    %1156 = vmatmul.mubr.bf16.gmra.mrb[0].mxu0 %v1121
    %v1157 = vpop.f32.mrb[0].mxu0
    %v1158 = vadd.f32 %v224, %v1157
    %v1159 = vpop.f32.mrb[0].mxu0
    %v1160 = vpop.f32.mrb[0].mxu0
    %v1161 = vpop.f32.mrb[0].mxu0
    %1162 = vdwg.mxu0
    %v1163 = vxor.u32 %v1158, 2147483648
    %v1164 = vmul.f32 %v1163, 1.442695
    %v1165 = vpow.pop %v1164
    %v1166 = vadd.f32 %v1165, 1.0
    %v1167 = vrcp.pop %v1166
    %v1168 = vmul.f32 1.0, %v1167
    %v1169 = vtanh.pop %v1158
    %v1170 = vmul.f32 %v1168, %v1031
    %1172 = vrot.lane.b32.xlu0 %v1169, 32
    %v1173 = vpop.permute.xlu0 %1172
    %v1175 = vmul.f32 %v1168, %v1173
    %1177 = vrot.lane.b32.xlu0 %v1175, 32
    %v1178 = vpop.permute.xlu0 %1177
    %v1180 = vadd.f32 %v1170, %v1178
    %v1181 = vtanh.pop %v1180
    %1183 = vrot.lane.b32.xlu0 %v1181, 32
    %v1184 = vpop.permute.xlu0 %1183
    %v1186 = vmul.f32 %v1168, %v1184
    %v1187 = vpack.c.bf16 %v1109, %v1109
    %1189 = vrot.lane.b32.xlu0 %v1187, 64
    %v1190 = vpop.permute.xlu0 %1189
    %v1192 = vsel %vm146, %v1190, 0
    %1194 = vmatprep.subr.bf16.mxu0 0
    %1195 = vmatpush1.bf16.msra.mxu0 %v36
    %1196 = vmatprep.subr.bf16.mxu0 0
    %1197 = vmatpush1.bf16.msra.mxu0 %v37
    %1198 = vmatprep.subr.bf16.mxu0 0
    %1199 = vmatpush1.bf16.msra.mxu0 0
    %1200 = vmatprep.subr.bf16.mxu0 0
    %1201 = vmatpush1.bf16.msra.mxu0 0
    %1202 = vmatprep.subr.bf16.mxu0 0
    %1203 = vmatpush1.bf16.msra.mxu0 0
    %1204 = vmatprep.subr.bf16.mxu0 0
    %1205 = vmatpush1.bf16.msra.mxu0 0
    %1206 = vmatprep.subr.bf16.mxu0 0
    %1207 = vmatpush1.bf16.msra.mxu0 0
    %1208 = vmatprep.subr.bf16.mxu0 0
    %1209 = vmatpush1.bf16.msra.mxu0 0
    %1210 = vmatprep.subr.bf16.mxu0 0
    %1211 = vmatpush1.bf16.msra.mxu0 0
    %1212 = vmatprep.subr.bf16.mxu0 0
    %1213 = vmatpush1.bf16.msra.mxu0 0
    %1214 = vmatprep.subr.bf16.mxu0 0
    %1215 = vmatpush1.bf16.msra.mxu0 0
    %1216 = vmatprep.subr.bf16.mxu0 0
    %1217 = vmatpush1.bf16.msra.mxu0 0
    %1218 = vmatprep.subr.bf16.mxu0 0
    %1219 = vmatpush1.bf16.msra.mxu0 0
    %1220 = vmatprep.subr.bf16.mxu0 0
    %1221 = vmatpush1.bf16.msra.mxu0 0
    %1222 = vmatprep.subr.bf16.mxu0 0
    %1223 = vmatpush1.bf16.msra.mxu0 0
    %1224 = vmatprep.subr.bf16.mxu0 0
    %1225 = vmatpush1.bf16.msra.mxu0 0
    %1226 = vmatprep.mubr.bf16.mxu0 0
    %1227 = vmatmul.mubr.bf16.gmra.mrb[0].mxu0 %v1192
    %v1228 = vpop.f32.mrb[0].mxu0
    %v1229 = vadd.f32 0.0, %v1228
    %v1230 = vpop.f32.mrb[0].mxu0
    %v1231 = vpop.f32.mrb[0].mxu0
    %v1232 = vpop.f32.mrb[0].mxu0
    %1233 = vdwg.mxu0
    %v1234 = vadd.f32 %v143, %v1229
    %v1235 = vxor.u32 %v1234, 2147483648
    %v1236 = vmul.f32 %v1235, 1.442695
    %v1237 = vpow.pop %v1236
    %v1238 = vadd.f32 %v1237, 1.0
    %v1239 = vrcp.pop %v1238
    %v1240 = vmul.f32 1.0, %v1239
    %v1241 = vtanh.pop %v1234
    %v1242 = vmul.f32 %v1240, %v1103
    %1244 = vrot.lane.b32.xlu0 %v1241, 32
    %v1245 = vpop.permute.xlu0 %1244
    %v1247 = vmul.f32 %v1240, %v1245
    %1249 = vrot.lane.b32.xlu0 %v1247, 32
    %v1250 = vpop.permute.xlu0 %1249
    %v1252 = vadd.f32 %v1242, %v1250
    %v1253 = vtanh.pop %v1252
    %1255 = vrot.lane.b32.xlu0 %v1253, 32
    %v1256 = vpop.permute.xlu0 %1255
    %v1258 = vmul.f32 %v1240, %v1256
    %1260 = vrot.lane.b32.xlu0 %v1258, 64
    %v1261 = vpop.permute.xlu0 %1260
    %1264 = vrot.lane.b32.xlu0 %v1186, 96
    %v1265 = vpop.permute.xlu0 %1264
    %v1267 = vsel %vm146, %v1261, %v1265
    %v1268 = vpack.c.bf16 %v1267, %v1267
    %v1270 = vsel %vm225, %v1268, 0
    %1272 = vmatprep.subr.bf16.mxu0 0
    %1273 = vmatpush1.bf16.msra.mxu0 %v47
    %1274 = vmatprep.subr.bf16.mxu0 0
    %1275 = vmatpush1.bf16.msra.mxu0 %v48
    %1276 = vmatprep.subr.bf16.mxu0 0
    %1277 = vmatpush1.bf16.msra.mxu0 %v49
    %1278 = vmatprep.subr.bf16.mxu0 0
    %1279 = vmatpush1.bf16.msra.mxu0 %v50
    %1280 = vmatprep.subr.bf16.mxu0 0
    %1281 = vmatpush1.bf16.msra.mxu0 0
    %1282 = vmatprep.subr.bf16.mxu0 0
    %1283 = vmatpush1.bf16.msra.mxu0 0
    %1284 = vmatprep.subr.bf16.mxu0 0
    %1285 = vmatpush1.bf16.msra.mxu0 0
    %1286 = vmatprep.subr.bf16.mxu0 0
    %1287 = vmatpush1.bf16.msra.mxu0 0
    %1288 = vmatprep.subr.bf16.mxu0 0
    %1289 = vmatpush1.bf16.msra.mxu0 0
    %1290 = vmatprep.subr.bf16.mxu0 0
    %1291 = vmatpush1.bf16.msra.mxu0 0
    %1292 = vmatprep.subr.bf16.mxu0 0
    %1293 = vmatpush1.bf16.msra.mxu0 0
    %1294 = vmatprep.subr.bf16.mxu0 0
    %1295 = vmatpush1.bf16.msra.mxu0 0
    %1296 = vmatprep.subr.bf16.mxu0 0
    %1297 = vmatpush1.bf16.msra.mxu0 0
    %1298 = vmatprep.subr.bf16.mxu0 0
    %1299 = vmatpush1.bf16.msra.mxu0 0
    %1300 = vmatprep.subr.bf16.mxu0 0
    %1301 = vmatpush1.bf16.msra.mxu0 0
    %1302 = vmatprep.subr.bf16.mxu0 0
    %1303 = vmatpush1.bf16.msra.mxu0 0
    %1304 = vmatprep.mubr.bf16.mxu0 0
    %1305 = vmatmul.mubr.bf16.gmra.mrb[0].mxu0 %v1270
    %v1306 = vpop.f32.mrb[0].mxu0
    %v1307 = vadd.f32 %v224, %v1306
    %v1308 = vpop.f32.mrb[0].mxu0
    %v1309 = vpop.f32.mrb[0].mxu0
    %v1310 = vpop.f32.mrb[0].mxu0
    %1311 = vdwg.mxu0
    %v1312 = vxor.u32 %v1307, 2147483648
    %v1313 = vmul.f32 %v1312, 1.442695
    %v1314 = vpow.pop %v1313
    %v1315 = vadd.f32 %v1314, 1.0
    %v1316 = vrcp.pop %v1315
    %v1317 = vmul.f32 1.0, %v1316
    %v1318 = vtanh.pop %v1307
    %v1319 = vmul.f32 %v1317, %v1180
    %1321 = vrot.lane.b32.xlu0 %v1318, 32
    %v1322 = vpop.permute.xlu0 %1321
    %v1324 = vmul.f32 %v1317, %v1322
    %1326 = vrot.lane.b32.xlu0 %v1324, 32
    %v1327 = vpop.permute.xlu0 %1326
    %v1329 = vadd.f32 %v1319, %v1327
    %v1330 = vtanh.pop %v1329
    %1332 = vrot.lane.b32.xlu0 %v1330, 32
    %v1333 = vpop.permute.xlu0 %1332
    %v1335 = vmul.f32 %v1317, %v1333
    %v1336 = vld [vmem:[#allocation2 + $0x80] sm:$0xff]
    %v1337 = vld [vmem:[#allocation2 + $0x88] sm:$0xff]
    %v1338 = vld [vmem:[#allocation2 + $0x90] sm:$0xff]
    %v1339 = vld [vmem:[#allocation2 + $0x98] sm:$0xff]
    %v1340 = vpack.c.bf16 %v1337, %v1336
    %v1341 = vpack.c.bf16 %v1339, %v1338
    %v1342 = vld [vmem:[#allocation2 + $0xa0] sm:$0xff]
    %v1343 = vpack.c.bf16 %v1342, %v1342
    %v1344 = vld [vmem:[#allocation2 + $0xa8] sm:$0x1]
    %v1345 = vpack.c.bf16 %v1335, %v1335
    %v1346 = vlaneseq
    %v1347 = vshrl.u32 %v1346, 7
    %v1348 = vsub.s32 0, %v1347
    %v1349 = vrot.slane %v1344, %v1348
    %1351 = vrot.lane.b32.xlu0 %v1345, 64
    %v1352 = vpop.permute.xlu0 %1351
    %v1354 = vsel %vm146, %v1352, 0
    %1356 = vmatprep.subr.bf16.mxu0 0
    %1357 = vmatpush1.bf16.msra.mxu0 %v1340
    %1358 = vmatprep.subr.bf16.mxu0 0
    %1359 = vmatpush1.bf16.msra.mxu0 %v1341
    %1360 = vmatprep.subr.bf16.mxu0 0
    %1361 = vmatpush1.bf16.msra.mxu0 0
    %1362 = vmatprep.subr.bf16.mxu0 0
    %1363 = vmatpush1.bf16.msra.mxu0 0
    %1364 = vmatprep.subr.bf16.mxu0 0
    %1365 = vmatpush1.bf16.msra.mxu0 0
    %1366 = vmatprep.subr.bf16.mxu0 0
    %1367 = vmatpush1.bf16.msra.mxu0 0
    %1368 = vmatprep.subr.bf16.mxu0 0
    %1369 = vmatpush1.bf16.msra.mxu0 0
    %1370 = vmatprep.subr.bf16.mxu0 0
    %1371 = vmatpush1.bf16.msra.mxu0 0
    %1372 = vmatprep.subr.bf16.mxu0 0
    %1373 = vmatpush1.bf16.msra.mxu0 0
    %1374 = vmatprep.subr.bf16.mxu0 0
    %1375 = vmatpush1.bf16.msra.mxu0 0
    %1376 = vmatprep.subr.bf16.mxu0 0
    %1377 = vmatpush1.bf16.msra.mxu0 0
    %1378 = vmatprep.subr.bf16.mxu0 0
    %1379 = vmatpush1.bf16.msra.mxu0 0
    %1380 = vmatprep.subr.bf16.mxu0 0
    %1381 = vmatpush1.bf16.msra.mxu0 0
    %1382 = vmatprep.subr.bf16.mxu0 0
    %1383 = vmatpush1.bf16.msra.mxu0 0
    %1384 = vmatprep.subr.bf16.mxu0 0
    %1385 = vmatpush1.bf16.msra.mxu0 0
    %1386 = vmatprep.subr.bf16.mxu0 0
    %1387 = vmatpush1.bf16.msra.mxu0 0
    %1388 = vmatprep.mubr.bf16.mxu0 0
    %1389 = vmatmul.mubr.bf16.gmra.mrb[0].mxu0 %v1354
    %v1390 = vpop.f32.mrb[0].mxu0
    %v1391 = vadd.f32 %v1349, %v1390
    %v1392 = vpop.f32.mrb[0].mxu0
    %v1393 = vpop.f32.mrb[0].mxu0
    %v1394 = vpop.f32.mrb[0].mxu0
    %1395 = vdwg.mxu0
    %v1396 = vmax.f32 %v1391, 0.0
    %v1397 = vpack.c.bf16 %v1396, %v1396
    %1400 = vrot.lane.b32.xlu0 %v1340, 96
    %v1401 = vpop.permute.xlu0 %1400
    %1402 = vrot.lane.b32.xlu0 %v1341, 96
    %v1403 = vpop.permute.xlu0 %1402
    %1407 = vrot.lane.b32.xlu0 %v1349, 96
    %v1408 = vpop.permute.xlu0 %1407
    %v1411 = vsel %vm146, %v1397, 0
    %1413 = vmatprep.subr.bf16.mxu0 0
    %1414 = vmatpush1.bf16.msra.mxu0 %v1401
    %1415 = vmatprep.subr.bf16.mxu0 0
    %1416 = vmatpush1.bf16.msra.mxu0 %v1403
    %1417 = vmatprep.subr.bf16.mxu0 0
    %1418 = vmatpush1.bf16.msra.mxu0 0
    %1419 = vmatprep.subr.bf16.mxu0 0
    %1420 = vmatpush1.bf16.msra.mxu0 0
    %1421 = vmatprep.subr.bf16.mxu0 0
    %1422 = vmatpush1.bf16.msra.mxu0 0
    %1423 = vmatprep.subr.bf16.mxu0 0
    %1424 = vmatpush1.bf16.msra.mxu0 0
    %1425 = vmatprep.subr.bf16.mxu0 0
    %1426 = vmatpush1.bf16.msra.mxu0 0
    %1427 = vmatprep.subr.bf16.mxu0 0
    %1428 = vmatpush1.bf16.msra.mxu0 0
    %1429 = vmatprep.subr.bf16.mxu0 0
    %1430 = vmatpush1.bf16.msra.mxu0 0
    %1431 = vmatprep.subr.bf16.mxu0 0
    %1432 = vmatpush1.bf16.msra.mxu0 0
    %1433 = vmatprep.subr.bf16.mxu0 0
    %1434 = vmatpush1.bf16.msra.mxu0 0
    %1435 = vmatprep.subr.bf16.mxu0 0
    %1436 = vmatpush1.bf16.msra.mxu0 0
    %1437 = vmatprep.subr.bf16.mxu0 0
    %1438 = vmatpush1.bf16.msra.mxu0 0
    %1439 = vmatprep.subr.bf16.mxu0 0
    %1440 = vmatpush1.bf16.msra.mxu0 0
    %1441 = vmatprep.subr.bf16.mxu0 0
    %1442 = vmatpush1.bf16.msra.mxu0 0
    %1443 = vmatprep.subr.bf16.mxu0 0
    %1444 = vmatpush1.bf16.msra.mxu0 0
    %1445 = vmatprep.mubr.bf16.mxu0 0
    %1446 = vmatmul.mubr.bf16.gmra.mrb[0].mxu0 %v1411
    %v1447 = vpop.f32.mrb[0].mxu0
    %v1448 = vadd.f32 %v1408, %v1447
    %v1449 = vpop.f32.mrb[0].mxu0
    %v1450 = vpop.f32.mrb[0].mxu0
    %v1451 = vpop.f32.mrb[0].mxu0
    %1452 = vdwg.mxu0
    %v1453 = vmul.f32 %v1448, 0.5
    %v1454 = vmul.f32 %v1453, 1.442695
    %v1455 = vpow.pop %v1454
    %v1456 = vld [vmem:[%s1] sm:$0xff]
    %1458 = vrot.lane.b32.xlu0 %v1455, 120
    %v1459 = vpop.permute.xlu0 %1458
    %v1461 = vmul.f32 %v1456, %v1459
    %v1462 = vadd.f32 %v1448, %v1461
    %v1463 = vmul.f32 %v1448, 1.442695
    %v1464 = vpow.pop %v1463
    %v1465 = vmul.f32 %v1448, %v1448
    %1467 = vrot.lane.b32.xlu0 %v1465, 8
    %v1468 = vpop.permute.xlu0 %1467
    %v1470 = vadd.f32 %v1464, %v1468
    %v1471 = vsub.f32 %v1470, %v1448
    %v1472 = vsub.f32 %v1471, 1.0
    %1474 = vrot.lane.b32.xlu0 %v1472, 120
    %v1475 = vpop.permute.xlu0 %1474
    %vm1477 = vcmask 64512
    %v1478 = vsel %vm1477, %v1475, 0.0
    %1479 = vadd.xlane.f32.xlu0 %v1478
    %v1480 = vpop.xlane.xlu0 %1479
    %v1481 = vmul.f32 %v1480, 0.5
    %v1482 = vpack.c.bf16 %v1462, %v1462
    %1483 = vrot.lane.b32.xlu0 %v1349, 80
    %v1484 = vpop.permute.xlu0 %1483
    %v1487 = vsel %vm1477, %v1482, 0
    %vm1489 = vcmask 1043456
    %v1491 = vsel %vm1489, %v1343, 0
    %1493 = vmatprep.subr.bf16.mxu0 0
    %1494 = vmatpush1.bf16.msra.mxu0 %v1491
    %1495 = vmatprep.subr.bf16.mxu0 0
    %1496 = vmatpush1.bf16.msra.mxu0 0
    %1497 = vmatprep.subr.bf16.mxu0 0
    %1498 = vmatpush1.bf16.msra.mxu0 0
    %1499 = vmatprep.subr.bf16.mxu0 0
    %1500 = vmatpush1.bf16.msra.mxu0 0
    %1501 = vmatprep.subr.bf16.mxu0 0
    %1502 = vmatpush1.bf16.msra.mxu0 0
    %1503 = vmatprep.subr.bf16.mxu0 0
    %1504 = vmatpush1.bf16.msra.mxu0 0
    %1505 = vmatprep.subr.bf16.mxu0 0
    %1506 = vmatpush1.bf16.msra.mxu0 0
    %1507 = vmatprep.subr.bf16.mxu0 0
    %1508 = vmatpush1.bf16.msra.mxu0 0
    %1509 = vmatprep.subr.bf16.mxu0 0
    %1510 = vmatpush1.bf16.msra.mxu0 0
    %1511 = vmatprep.subr.bf16.mxu0 0
    %1512 = vmatpush1.bf16.msra.mxu0 0
    %1513 = vmatprep.subr.bf16.mxu0 0
    %1514 = vmatpush1.bf16.msra.mxu0 0
    %1515 = vmatprep.subr.bf16.mxu0 0
    %1516 = vmatpush1.bf16.msra.mxu0 0
    %1517 = vmatprep.subr.bf16.mxu0 0
    %1518 = vmatpush1.bf16.msra.mxu0 0
    %1519 = vmatprep.subr.bf16.mxu0 0
    %1520 = vmatpush1.bf16.msra.mxu0 0
    %1521 = vmatprep.subr.bf16.mxu0 0
    %1522 = vmatpush1.bf16.msra.mxu0 0
    %1523 = vmatprep.subr.bf16.mxu0 0
    %1524 = vmatpush1.bf16.msra.mxu0 0
    %1525 = vmatprep.mubr.bf16.mxu0 0
    %1526 = vmatmul.mubr.bf16.gmra.mrb[0].mxu0 %v1487
    %v1527 = vpop.f32.mrb[0].mxu0
    %v1528 = vadd.f32 %v1484, %v1527
    %v1529 = vpop.f32.mrb[0].mxu0
    %v1530 = vpop.f32.mrb[0].mxu0
    %v1531 = vpop.f32.mrb[0].mxu0
    %1532 = vdwg.mxu0
    %v1533 = vmax.f32 %v1528, 0.0
    %v1534 = vpack.c.bf16 %v1533, %v1533
    %1535 = vrot.lane.b32.xlu0 %v1340, 80
    %v1536 = vpop.permute.xlu0 %1535
    %1537 = vrot.lane.b32.xlu0 %v1341, 80
    %v1538 = vpop.permute.xlu0 %1537
    %1541 = vrot.lane.b32.xlu0 %v1349, 48
    %v1542 = vpop.permute.xlu0 %1541
    %v1545 = vsel %vm146, %v1534, 0
    %1547 = vmatprep.subr.bf16.mxu0 0
    %1548 = vmatpush1.bf16.msra.mxu0 %v1536
    %1549 = vmatprep.subr.bf16.mxu0 0
    %1550 = vmatpush1.bf16.msra.mxu0 %v1538
    %1551 = vmatprep.subr.bf16.mxu0 0
    %1552 = vmatpush1.bf16.msra.mxu0 0
    %1553 = vmatprep.subr.bf16.mxu0 0
    %1554 = vmatpush1.bf16.msra.mxu0 0
    %1555 = vmatprep.subr.bf16.mxu0 0
    %1556 = vmatpush1.bf16.msra.mxu0 0
    %1557 = vmatprep.subr.bf16.mxu0 0
    %1558 = vmatpush1.bf16.msra.mxu0 0
    %1559 = vmatprep.subr.bf16.mxu0 0
    %1560 = vmatpush1.bf16.msra.mxu0 0
    %1561 = vmatprep.subr.bf16.mxu0 0
    %1562 = vmatpush1.bf16.msra.mxu0 0
    %1563 = vmatprep.subr.bf16.mxu0 0
    %1564 = vmatpush1.bf16.msra.mxu0 0
    %1565 = vmatprep.subr.bf16.mxu0 0
    %1566 = vmatpush1.bf16.msra.mxu0 0
    %1567 = vmatprep.subr.bf16.mxu0 0
    %1568 = vmatpush1.bf16.msra.mxu0 0
    %1569 = vmatprep.subr.bf16.mxu0 0
    %1570 = vmatpush1.bf16.msra.mxu0 0
    %1571 = vmatprep.subr.bf16.mxu0 0
    %1572 = vmatpush1.bf16.msra.mxu0 0
    %1573 = vmatprep.subr.bf16.mxu0 0
    %1574 = vmatpush1.bf16.msra.mxu0 0
    %1575 = vmatprep.subr.bf16.mxu0 0
    %1576 = vmatpush1.bf16.msra.mxu0 0
    %1577 = vmatprep.subr.bf16.mxu0 0
    %1578 = vmatpush1.bf16.msra.mxu0 0
    %1579 = vmatprep.mubr.bf16.mxu0 0
    %1580 = vmatmul.mubr.bf16.gmra.mrb[0].mxu0 %v1545
    %v1581 = vpop.f32.mrb[0].mxu0
    %v1582 = vadd.f32 %v1542, %v1581
    %v1583 = vpop.f32.mrb[0].mxu0
    %v1584 = vpop.f32.mrb[0].mxu0
    %v1585 = vpop.f32.mrb[0].mxu0
    %1586 = vdwg.mxu0
    %1588 = vrot.lane.b32.xlu0 %v1582, 8
    %v1589 = vpop.permute.xlu0 %1588
    %v1591 = vsel %vm1477, %v1462, %v1589
    %vm1592 = vcmask 195584
    %v1593 = vsel %vm1592, %v1591, %v1481
    %v1594 = vsel %vm146, %v1593, 0.0
    %1595 = vst [vmem:[%s3] sm:$0xff] %v1594
    // Predicated region
    $region18: #{s2one_forward.1} parent=1 // pred_check
      _
    $region19: #{s2one_forward.1} parent=1 // pred_check_branch
      %1597 = sbr.rel (0) target = $region21
    $region20: #{s2one_forward.1} parent=1 // pred_region
      _
    $region21: #{s2one_forward.1} parent=1 // pred_fallthru
      _
    // Predicated region
    $region22: #{s2one_forward.1} parent=1 // pred_check
      _
    $region23: #{s2one_forward.1} parent=1 // pred_check_branch
      %1599 = sbr.rel (0) target = $region25
    $region24: #{s2one_forward.1} parent=1 // pred_region
      _
    $region25: #{s2one_forward.1} parent=1 // pred_fallthru
      _
    %1600 = vsyncpa [#allocation3], 1

</llo_original>
